<compile_context>
chip_gen: v7x
topology: tpu7x:2x2x1
jax: 0.10.0
libtpu: 0.0.40
codegen_flags: <defaults>
</compile_context>

<pallas_src>
import functools

import jax
import jax.numpy as jnp
from jax.experimental import pallas as pl
from jax.experimental.pallas import tpu as pltpu


def _softplus(z):
    # Numerically-stable softplus, same formulation as PyTorch BCEWithLogitsLoss:
    # max(z, 0) + log1p(exp(-|z|))
    return jnp.maximum(z, 0.0) + jnp.log1p(jnp.exp(-jnp.abs(z)))


def gen_loss_kernel(noise_ref,
                    gw1_ref, gb1_ref, gw2_ref, gb2_ref,
                    dw1_ref, db1_ref, dw2r_ref, db2_ref,
                    loss_ref):
    # ---- generator: Z -> H (ReLU) -> D  (bf16 MXU, f32 accumulation) -------
    g_h = jnp.dot(noise_ref[...].astype(jnp.bfloat16), gw1_ref[...],
                  preferred_element_type=jnp.float32) + gb1_ref[...]
    g_h = jnp.maximum(g_h, 0.0)
    fake = jnp.dot(g_h.astype(jnp.bfloat16), gw2_ref[...],
                   preferred_element_type=jnp.float32) + gb2_ref[...]

    # ---- discriminator: D -> H (LeakyReLU 0.2) -> 1 -------------------------
    h = jnp.dot(fake.astype(jnp.bfloat16), dw1_ref[...],
                preferred_element_type=jnp.float32) + db1_ref[...]
    h = jnp.where(h > 0.0, h, 0.2 * h)
    # Final (H, 1) layer as VPU multiply + XLU lane reduce (avoid N=1 MXU matmul).
    logits = jnp.sum(h * dw2r_ref[...], axis=-1, keepdims=True) + db2_ref[...]

    # ---- BCEWithLogits(pred, ones) == softplus(-pred), per sample -----------
    loss_ref[...] = _softplus(-logits)


def basic_gen_loss(noise, params, *, tile_b=128):
    """noise: (B, Z) — the create_noise() draw; params: 8 weight/bias arrays (f32)."""
    gw1, gb1, gw2, gb2, dw1, db1, dw2, db2 = params
    B, Z = noise.shape
    H = gw1.shape[1]
    D = gw2.shape[1]
    tile_b = min(tile_b, B)
    assert B % tile_b == 0 and tile_b % 8 == 0, "batch must tile cleanly"

    # MXU operands in bf16 (f32 accumulation in-kernel); biases / final row stay f32.
    gw1b = gw1.astype(jnp.bfloat16)
    gw2b = gw2.astype(jnp.bfloat16)
    dw1b = dw1.astype(jnp.bfloat16)
    dw2_row = dw2.reshape(1, H).astype(jnp.float32)

    const2 = lambda i: (0, 0)  # resident (untiled) weight/bias blocks

    flops = 2 * B * (Z * H + H * D + D * H + H)
    transcendentals = 2 * B  # exp + log1p per batch row
    bytes_accessed = (noise.size * 4
                      + (gw1b.size + gw2b.size + dw1b.size) * 2
                      + (gb1.size + gb2.size + db1.size
                         + dw2_row.size + db2.size) * 4
                      + B * 4)

    per_sample = pl.pallas_call(
        gen_loss_kernel,
        out_shape=jax.ShapeDtypeStruct((B, 1), jnp.float32),
        grid=(B // tile_b,),
        in_specs=[
            pl.BlockSpec((tile_b, Z), lambda i: (i, 0)),  # noise tiles (pipelined)
            pl.BlockSpec((Z, H), const2),                 # generator weights/biases
            pl.BlockSpec((1, H), const2),
            pl.BlockSpec((H, D), const2),
            pl.BlockSpec((1, D), const2),
            pl.BlockSpec((D, H), const2),                 # discriminator weights/biases
            pl.BlockSpec((1, H), const2),
            pl.BlockSpec((1, H), const2),                 # dw2 as a (1, H) row
            pl.BlockSpec((1, 1), const2),
        ],
        out_specs=pl.BlockSpec((tile_b, 1), lambda i: (i, 0)),  # per-tile, independent
        compiler_params=pltpu.CompilerParams(
            # batch tiles are independent -> megacore-shardable on v7x
            dimension_semantics=("parallel",),
            # well under 1 MiB of VMEM used; fits v7x's 64 MiB physical VMEM too
            vmem_limit_bytes=32 * 1024 * 1024,
        ),
        cost_estimate=pl.CostEstimate(
            flops=flops,
            transcendentals=transcendentals,
            bytes_accessed=bytes_accessed,
        ),
    )(noise, gw1b, gb1, gw2b, gb2, dw1b, db1, dw2_row, db2)

    # BCEWithLogitsLoss reduction='mean' over the (B, 1) predictions.
    return jnp.mean(per_sample)


def _reference(noise, params):
    """Pure-JAX reference with the same bf16-MXU / f32-VPU precision choices."""
    gw1, gb1, gw2, gb2, dw1, db1, dw2, db2 = params
    H = gw1.shape[1]
    gw1b, gw2b, dw1b = (w.astype(jnp.bfloat16) for w in (gw1, gw2, dw1))
    dw2_row = dw2.reshape(1, H).astype(jnp.float32)

    g_h = jnp.dot(noise.astype(jnp.bfloat16), gw1b,
                  preferred_element_type=jnp.float32) + gb1
    g_h = jnp.maximum(g_h, 0.0)
    fake = jnp.dot(g_h.astype(jnp.bfloat16), gw2b,
                   preferred_element_type=jnp.float32) + gb2

    h = jnp.dot(fake.astype(jnp.bfloat16), dw1b,
                preferred_element_type=jnp.float32) + db1
    h = jnp.where(h > 0.0, h, 0.2 * h)
    logits = jnp.sum(h * dw2_row, axis=-1, keepdims=True) + db2

    return jnp.mean(_softplus(-logits))


if __name__ == "__main__":
    # 128-aligned feature dims, batch tiled by 128 -> grid of 2 steps.
    B, Z, H, D, TB = 256, 128, 128, 256, 128

    key = jax.random.PRNGKey(0)
    ks = jax.random.split(key, 10)

    # Deterministic parameter init (scaled normals), standard MLP GAN heads.
    gw1 = jax.random.normal(ks[0], (Z, H), jnp.float32) * 0.1
    gb1 = jax.random.normal(ks[1], (1, H), jnp.float32) * 0.01
    gw2 = jax.random.normal(ks[2], (H, D), jnp.float32) * 0.1
    gb2 = jax.random.normal(ks[3], (1, D), jnp.float32) * 0.01
    dw1 = jax.random.normal(ks[4], (D, H), jnp.float32) * 0.1
    db1 = jax.random.normal(ks[5], (1, H), jnp.float32) * 0.01
    dw2 = jax.random.normal(ks[6], (H, 1), jnp.float32) * 0.1
    db2 = jax.random.normal(ks[7], (1, 1), jnp.float32) * 0.01
    params = (gw1, gb1, gw2, gb2, dw1, db1, dw2, db2)

    # create_noise(batch_size, input_dim) equivalent (drawn on host for determinism).
    # TODO(synk): could move noise generation in-kernel with pltpu.prng_seed/prng_random_bits.
    noise = jax.random.normal(ks[8], (B, Z), jnp.float32)

    loss = jax.block_until_ready(basic_gen_loss(noise, params, tile_b=TB))
    ref = _reference(noise, params)

    assert jnp.isfinite(loss), "non-finite loss"
    assert jnp.allclose(loss, ref, rtol=1e-3, atol=1e-3), (loss, ref)
    print("KERNEL_OK")
</pallas_src>

<mosaic_0001>
module attributes {stable_mosaic.version = 11 : i64} {
  func.func @gen_loss_kernel(%arg0: i32, %arg1: memref<128x128xf32, #tpu.memory_space<vmem>>, %arg2: memref<128x128xbf16, #tpu.memory_space<vmem>>, %arg3: memref<1x128xf32, #tpu.memory_space<vmem>>, %arg4: memref<128x256xbf16, #tpu.memory_space<vmem>>, %arg5: memref<1x256xf32, #tpu.memory_space<vmem>>, %arg6: memref<256x128xbf16, #tpu.memory_space<vmem>>, %arg7: memref<1x128xf32, #tpu.memory_space<vmem>>, %arg8: memref<1x128xf32, #tpu.memory_space<vmem>>, %arg9: memref<1x1xf32, #tpu.memory_space<vmem>>, %arg10: memref<128x1xf32, #tpu.memory_space<vmem>>) attributes {dimension_semantics = [#tpu.dimension_semantics<parallel>], iteration_bounds = array<i64: 2>, scalar_prefetch = 0 : i64, scratch_operands = 0 : i64, tpu.core_type = #tpu.core_type<tc>, window_params = [{transform_indices = @transform_0, window_bounds = array<i64: 128, 128>}, {pipeline_mode = #tpu.pipeline_mode<synchronous>, transform_indices = @transform_1, window_bounds = array<i64: 128, 128>}, {pipeline_mode = #tpu.pipeline_mode<synchronous>, transform_indices = @transform_2, window_bounds = array<i64: 1, 128>}, {pipeline_mode = #tpu.pipeline_mode<synchronous>, transform_indices = @transform_3, window_bounds = array<i64: 128, 256>}, {pipeline_mode = #tpu.pipeline_mode<synchronous>, transform_indices = @transform_4, window_bounds = array<i64: 1, 256>}, {pipeline_mode = #tpu.pipeline_mode<synchronous>, transform_indices = @transform_5, window_bounds = array<i64: 256, 128>}, {pipeline_mode = #tpu.pipeline_mode<synchronous>, transform_indices = @transform_6, window_bounds = array<i64: 1, 128>}, {pipeline_mode = #tpu.pipeline_mode<synchronous>, transform_indices = @transform_7, window_bounds = array<i64: 1, 128>}, {pipeline_mode = #tpu.pipeline_mode<synchronous>, transform_indices = @transform_8, window_bounds = array<i64: 1, 1>}, {transform_indices = @transform_9, window_bounds = array<i64: 128, 1>}]} {
    %c0 = arith.constant 0 : index
    %c0_0 = arith.constant 0 : index
    %0 = vector.load %arg1[%c0, %c0_0] : memref<128x128xf32, #tpu.memory_space<vmem>>, vector<128x128xf32>
    %1 = arith.truncf %0 : vector<128x128xf32> to vector<128x128xbf16>
    %c0_1 = arith.constant 0 : index
    %c0_2 = arith.constant 0 : index
    %2 = vector.load %arg2[%c0_1, %c0_2] : memref<128x128xbf16, #tpu.memory_space<vmem>>, vector<128x128xbf16>
    %cst = arith.constant dense<0.000000e+00> : vector<128x128xf32>
    %3 = tpu.matmul %1, %2, %cst {dimension_numbers = #tpu.dot_dimension_numbers<[1], [0], [0], [1], [0, 0, 1, 1], [], []>} : vector<128x128xbf16>, vector<128x128xbf16>, vector<128x128xf32> -> vector<128x128xf32>
    %c0_3 = arith.constant 0 : index
    %c0_4 = arith.constant 0 : index
    %4 = vector.load %arg3[%c0_3, %c0_4] : memref<1x128xf32, #tpu.memory_space<vmem>>, vector<1x128xf32>
    %5 = vector.broadcast %4 : vector<1x128xf32> to vector<128x128xf32>
    %6 = arith.addf %3, %5 : vector<128x128xf32>
    %cst_5 = arith.constant 0.000000e+00 : f32
    %7 = vector.broadcast %cst_5 : f32 to vector<128x128xf32>
    %8 = arith.maximumf %6, %7 : vector<128x128xf32>
    %9 = arith.truncf %8 : vector<128x128xf32> to vector<128x128xbf16>
    %c0_6 = arith.constant 0 : index
    %c0_7 = arith.constant 0 : index
    %10 = vector.load %arg4[%c0_6, %c0_7] : memref<128x256xbf16, #tpu.memory_space<vmem>>, vector<128x256xbf16>
    %cst_8 = arith.constant dense<0.000000e+00> : vector<128x256xf32>
    %11 = tpu.matmul %9, %10, %cst_8 {dimension_numbers = #tpu.dot_dimension_numbers<[1], [0], [0], [1], [0, 0, 1, 1], [], []>} : vector<128x128xbf16>, vector<128x256xbf16>, vector<128x256xf32> -> vector<128x256xf32>
    %c0_9 = arith.constant 0 : index
    %c0_10 = arith.constant 0 : index
    %12 = vector.load %arg5[%c0_9, %c0_10] : memref<1x256xf32, #tpu.memory_space<vmem>>, vector<1x256xf32>
    %13 = vector.broadcast %12 : vector<1x256xf32> to vector<128x256xf32>
    %14 = arith.addf %11, %13 : vector<128x256xf32>
    %15 = arith.truncf %14 : vector<128x256xf32> to vector<128x256xbf16>
    %c0_11 = arith.constant 0 : index
    %c0_12 = arith.constant 0 : index
    %16 = vector.load %arg6[%c0_11, %c0_12] : memref<256x128xbf16, #tpu.memory_space<vmem>>, vector<256x128xbf16>
    %cst_13 = arith.constant dense<0.000000e+00> : vector<128x128xf32>
    %17 = tpu.matmul %15, %16, %cst_13 {dimension_numbers = #tpu.dot_dimension_numbers<[1], [0], [0], [1], [0, 0, 1, 1], [], []>} : vector<128x256xbf16>, vector<256x128xbf16>, vector<128x128xf32> -> vector<128x128xf32>
    %c0_14 = arith.constant 0 : index
    %c0_15 = arith.constant 0 : index
    %18 = vector.load %arg7[%c0_14, %c0_15] : memref<1x128xf32, #tpu.memory_space<vmem>>, vector<1x128xf32>
    %19 = vector.broadcast %18 : vector<1x128xf32> to vector<128x128xf32>
    %20 = arith.addf %17, %19 : vector<128x128xf32>
    %cst_16 = arith.constant 0.000000e+00 : f32
    %21 = vector.broadcast %cst_16 : f32 to vector<128x128xf32>
    %22 = arith.cmpf ogt, %20, %21 : vector<128x128xf32>
    %cst_17 = arith.constant 2.000000e-01 : f32
    %23 = vector.broadcast %cst_17 : f32 to vector<128x128xf32>
    %24 = arith.mulf %23, %20 : vector<128x128xf32>
    %25 = arith.select %22, %20, %24 : vector<128x128xi1>, vector<128x128xf32>
    %c0_18 = arith.constant 0 : index
    %c0_19 = arith.constant 0 : index
    %26 = vector.load %arg8[%c0_18, %c0_19] : memref<1x128xf32, #tpu.memory_space<vmem>>, vector<1x128xf32>
    %27 = vector.broadcast %26 : vector<1x128xf32> to vector<128x128xf32>
    %28 = arith.mulf %25, %27 : vector<128x128xf32>
    %cst_20 = arith.constant dense<0.000000e+00> : vector<128xf32>
    %29 = vector.multi_reduction <add>, %28, %cst_20 [1] : vector<128x128xf32> to vector<128xf32>
    %30 = vector.shape_cast %29 : vector<128xf32> to vector<128x1xf32>
    %c0_21 = arith.constant 0 : index
    %c0_22 = arith.constant 0 : index
    %31 = vector.load %arg9[%c0_21, %c0_22] : memref<1x1xf32, #tpu.memory_space<vmem>>, vector<1x1xf32>
    %32 = vector.broadcast %31 : vector<1x1xf32> to vector<128x1xf32>
    %33 = arith.addf %30, %32 : vector<128x1xf32>
    %cst_23 = arith.constant 0.000000e+00 : f32
    %34 = vector.broadcast %cst_23 : f32 to vector<128x1xf32>
    %35 = arith.subf %34, %33 : vector<128x1xf32>
    %cst_24 = arith.constant 0.000000e+00 : f32
    %36 = vector.broadcast %cst_24 : f32 to vector<128x1xf32>
    %37 = arith.maximumf %35, %36 : vector<128x1xf32>
    %38 = math.absf %35 : vector<128x1xf32>
    %cst_25 = arith.constant 0.000000e+00 : f32
    %39 = vector.broadcast %cst_25 : f32 to vector<128x1xf32>
    %40 = arith.subf %39, %38 : vector<128x1xf32>
    %41 = math.exp %40 : vector<128x1xf32>
    %42 = math.log1p %41 : vector<128x1xf32>
    %43 = arith.addf %37, %42 : vector<128x1xf32>
    %c0_26 = arith.constant 0 : index
    %c0_27 = arith.constant 0 : index
    %44 = vector.load %arg10[%c0_26, %c0_27] : memref<128x1xf32, #tpu.memory_space<vmem>>, vector<128x1xf32>
    tpu.vector_store %arg10[%c0_26, %c0_27], %43 {strides = array<i32>} : memref<128x1xf32, #tpu.memory_space<vmem>>, vector<128x1xf32>,
    return
  }
  func.func @transform_0(%arg0: i32) -> (i32, i32) {
    %c0_i32 = arith.constant 0 : i32
    %c0_i32_0 = arith.constant 0 : i32
    return %arg0, %c0_i32 : i32, i32
  }
  func.func @transform_1(%arg0: i32) -> (i32, i32) {
    %c0_i32 = arith.constant 0 : i32
    %c0_i32_0 = arith.constant 0 : i32
    %c0_i32_1 = arith.constant 0 : i32
    return %c0_i32, %c0_i32_0 : i32, i32
  }
  func.func @transform_2(%arg0: i32) -> (i32, i32) {
    %c0_i32 = arith.constant 0 : i32
    %c0_i32_0 = arith.constant 0 : i32
    %c0_i32_1 = arith.constant 0 : i32
    return %c0_i32, %c0_i32_0 : i32, i32
  }
  func.func @transform_3(%arg0: i32) -> (i32, i32) {
    %c0_i32 = arith.constant 0 : i32
    %c0_i32_0 = arith.constant 0 : i32
    %c0_i32_1 = arith.constant 0 : i32
    return %c0_i32, %c0_i32_0 : i32, i32
  }
  func.func @transform_4(%arg0: i32) -> (i32, i32) {
    %c0_i32 = arith.constant 0 : i32
    %c0_i32_0 = arith.constant 0 : i32
    %c0_i32_1 = arith.constant 0 : i32
    return %c0_i32, %c0_i32_0 : i32, i32
  }
  func.func @transform_5(%arg0: i32) -> (i32, i32) {
    %c0_i32 = arith.constant 0 : i32
    %c0_i32_0 = arith.constant 0 : i32
    %c0_i32_1 = arith.constant 0 : i32
    return %c0_i32, %c0_i32_0 : i32, i32
  }
  func.func @transform_6(%arg0: i32) -> (i32, i32) {
    %c0_i32 = arith.constant 0 : i32
    %c0_i32_0 = arith.constant 0 : i32
    %c0_i32_1 = arith.constant 0 : i32
    return %c0_i32, %c0_i32_0 : i32, i32
  }
  func.func @transform_7(%arg0: i32) -> (i32, i32) {
    %c0_i32 = arith.constant 0 : i32
    %c0_i32_0 = arith.constant 0 : i32
    %c0_i32_1 = arith.constant 0 : i32
    return %c0_i32, %c0_i32_0 : i32, i32
  }
  func.func @transform_8(%arg0: i32) -> (i32, i32) {
    %c0_i32 = arith.constant 0 : i32
    %c0_i32_0 = arith.constant 0 : i32
    %c0_i32_1 = arith.constant 0 : i32
    return %c0_i32, %c0_i32_0 : i32, i32
  }
  func.func @transform_9(%arg0: i32) -> (i32, i32) {
    %c0_i32 = arith.constant 0 : i32
    %c0_i32_0 = arith.constant 0 : i32
    return %arg0, %c0_i32 : i32, i32
  }
}

</mosaic_0001>

<llo_original>
// kernel: tpu_custom_call.1
$region0: #{tpu_custom_call.1}
  #allocation0 [shape = 'u32[]', space=smem, size = 0x4, offset = 0x4, fixed_abs, tag = 'smem constant byte address 0x4 - core index']
  #allocation1 [shape = 'u32[144,128]{1,0:T(1,128)}', space=vmem, size = 0x12000, scoped, tag = 'internal scratch']
  #allocation2 [shape = 'f32[1,1]{1,0:T(1,128)S(1)}', space=vmem, size = 0x200, scoped, tag = 'scoped memory for tpu_custom_call.1']
  %s0 = inlined_call_operand.hbm [shape: f32[256,128], index: 0, kind: input, shape index: {}]
  %s1 = inlined_call_operand.hbm [shape: bf16[128,128], index: 1, kind: input, shape index: {}]
  %s2 = inlined_call_operand.vmem [shape: f32[1,128], index: 2, kind: input, shape index: {}]
  %s3 = inlined_call_operand.hbm [shape: bf16[128,256], index: 3, kind: input, shape index: {}]
  %s4 = inlined_call_operand.vmem [shape: f32[1,256], index: 4, kind: input, shape index: {}]
  %s5 = inlined_call_operand.hbm [shape: bf16[256,128], index: 5, kind: input, shape index: {}]
  %s6 = inlined_call_operand.vmem [shape: f32[1,128], index: 6, kind: input, shape index: {}]
  %s7 = inlined_call_operand.vmem [shape: f32[1,128], index: 7, kind: input, shape index: {}]
  %s8 = inlined_call_operand.<no memory space> [shape: f32[1,1], index: 8, kind: input, shape index: {}]
  %s9 = inlined_call_operand.vmem [shape: f32[256,1], index: 9, kind: output, shape index: {}]
  %s10 = sld [smem:[#allocation0]]
  $region85: #{tpu_custom_call.1} parent=0
    _
  %s12 = ssub.s32 1, %s10
  %s13 = scalar_select 0, %s12, %s10
  %v14 = vstv %s8
  %15 = vst [vmem:[#allocation2] sm:$0x1] %v14
  $region1: #{tpu_custom_call.1} parent=0
    #allocation3 [shape = 'u8[131072]{0}', space=vmem, size = 0x20000, scoped, tag = 'input window, operand 0']
    #allocation4 [shape = 's32[2]{0}', space=sflag, size = 0x8, scoped, tag = 'scoped memory for tpu_custom_call.1']
    #allocation5 [shape = 'u8[32768]{0}', space=vmem, size = 0x8000, scoped, tag = 'input window, operand 1, single buffered']
    #allocation6 [shape = 's32[1]{0}', space=sflag, size = 0x4, scoped, tag = 'scoped memory for tpu_custom_call.1']
    #allocation7 [shape = 'u8[65536]{0}', space=vmem, size = 0x10000, scoped, tag = 'input window, operand 3, single buffered']
    #allocation8 [shape = 'u8[65536]{0}', space=vmem, size = 0x10000, scoped, tag = 'input window, operand 5, single buffered']
    #allocation9 [shape = 's32[1]{0}', space=sflag, size = 0x4, scoped, tag = 'scoped memory for tpu_custom_call.1']
    %16 = vsyncpa [#allocation4], 0
    %s17 = scalar_lea.sflag [#allocation4], 1
    %18 = vsyncpa %s17, 0
    %19 = vsyncpa [#allocation6], 0
    %20 = vsyncpa [#allocation9], 0
    loop: start=0, step=1, limit=4
    $region2: #{tpu_custom_call.1} parent=1 // loop_pre_header
      _
    $region3: #{tpu_custom_call.1} parent=1 // loop_header
      %s22 = sphi 0, %s26
      %p23 = scmp.ge.s32.totalorder %s22, 4
      %s32 = sphi 0, %s34
      %s35 = sphi 0, %s32
      %s36 = sphi 0, %s35
      %s52 = sphi 0, %s36
      %s56 = sphi 0, %s56
      %s58 = sphi 0, %s56
      %s59 = sphi 0, %s58
      %s73 = sphi 0, %s59
      %s77 = sphi 0, %s77
      %s79 = sphi 0, %s77
      %s80 = sphi 0, %s79
      %s94 = sphi 0, %s80
      %s98 = sphi 0, %s98
      %s100 = sphi 0, %s98
      %s101 = sphi 0, %s100
      %s115 = sphi 0, %s101
      %s119 = sphi 0, %s119
      %s121 = sphi 0, %s119
      %s122 = sphi 0, %s121
      %s136 = sphi 0, %s122
      %s140 = sphi 0, %s140
      %s142 = sphi 0, %s140
      %s143 = sphi 0, %s142
      %s157 = sphi 0, %s143
      %s161 = sphi 0, %s161
      %s163 = sphi 0, %s161
      %s164 = sphi 0, %s163
      %s178 = sphi 0, %s164
      %s182 = sphi 0, %s182
      %s184 = sphi 0, %s182
      %s185 = sphi 0, %s184
      %s199 = sphi 0, %s185
      %s203 = sphi 0, %s203
      %s205 = sphi 0, %s203
      %s206 = sphi 0, %s205
      %s220 = sphi 0, %s206
      %s226 = sphi 0, %s228
      %s229 = sphi 0, %s226
      %s230 = sphi 0, %s229
      %s246 = sphi 0, %s230
    $region4: #{tpu_custom_call.1} parent=1 // loop_header_branch
      %25 = sbr.rel (%p23) target = $region8
    $region5: #{tpu_custom_call.1} parent=1 // loop_body
      %s27 = ssub.s32 %s22, 1
      %s28 = ssub.s32 %s22, 2
      %s29 = sadd.s32 %s22, 1
      %s30 = ssub.s32 %s22, %s29
      %p31 = scmp.eq.s32.totalorder %s30, 0
      %s33 = sadd.s32 %s32, 1
      %s34 = scalar_select %p31, %s32, %s33
      %p37 = pneg %p31
      %p38 = scmp.eq.s32.totalorder %s22, 1
      %p39 = por %p37, %p38
      %p40 = scmp.ne.s32.totalorder %s32, %s35
      %p41 = scmp.eq.s32.totalorder %s22, 0
      %p42 = por %p40, %p41
      %p43 = scmp.ne.s32.totalorder %s32, %s35
      %p44 = scmp.eq.s32.totalorder %s27, 1
      %p45 = por %p43, %p44
      %p46 = scmp.ne.s32.totalorder %s35, %s36
      %p47 = scmp.eq.s32.totalorder %s27, 0
      %p48 = por %p46, %p47
      %p49 = scmp.ne.s32.totalorder %s35, %s36
      %p50 = scmp.eq.s32.totalorder %s28, 1
      %p51 = por %p49, %p50
      %p53 = scmp.ne.s32.totalorder %s36, %s52
      %p54 = scmp.eq.s32.totalorder %s28, 0
      %p55 = por %p53, %p54
      %s57 = sadd.s32 %s56, 1
      %p60 = scmp.eq.s32.totalorder %s22, 1
      %p61 = scmp.ne.s32.totalorder %s56, %s58
      %p62 = scmp.eq.s32.totalorder %s22, 0
      %p63 = por %p61, %p62
      %p64 = scmp.ne.s32.totalorder %s56, %s58
      %p65 = scmp.eq.s32.totalorder %s27, 1
      %p66 = por %p64, %p65
      %p67 = scmp.ne.s32.totalorder %s58, %s59
      %p68 = scmp.eq.s32.totalorder %s27, 0
      %p69 = por %p67, %p68
      %p70 = scmp.ne.s32.totalorder %s58, %s59
      %p71 = scmp.eq.s32.totalorder %s28, 1
      %p72 = por %p70, %p71
      %p74 = scmp.ne.s32.totalorder %s59, %s73
      %p75 = scmp.eq.s32.totalorder %s28, 0
      %p76 = por %p74, %p75
      %s78 = sadd.s32 %s77, 1
      %p81 = scmp.eq.s32.totalorder %s22, 1
      %p82 = scmp.ne.s32.totalorder %s77, %s79
      %p83 = scmp.eq.s32.totalorder %s22, 0
      %p84 = por %p82, %p83
      %p85 = scmp.ne.s32.totalorder %s77, %s79
      %p86 = scmp.eq.s32.totalorder %s27, 1
      %p87 = por %p85, %p86
      %p88 = scmp.ne.s32.totalorder %s79, %s80
      %p89 = scmp.eq.s32.totalorder %s27, 0
      %p90 = por %p88, %p89
      %p91 = scmp.ne.s32.totalorder %s79, %s80
      %p92 = scmp.eq.s32.totalorder %s28, 1
      %p93 = por %p91, %p92
      %p95 = scmp.ne.s32.totalorder %s80, %s94
      %p96 = scmp.eq.s32.totalorder %s28, 0
      %p97 = por %p95, %p96
      %s99 = sadd.s32 %s98, 1
      %p102 = scmp.eq.s32.totalorder %s22, 1
      %p103 = scmp.ne.s32.totalorder %s98, %s100
      %p104 = scmp.eq.s32.totalorder %s22, 0
      %p105 = por %p103, %p104
      %p106 = scmp.ne.s32.totalorder %s98, %s100
      %p107 = scmp.eq.s32.totalorder %s27, 1
      %p108 = por %p106, %p107
      %p109 = scmp.ne.s32.totalorder %s100, %s101
      %p110 = scmp.eq.s32.totalorder %s27, 0
      %p111 = por %p109, %p110
      %p112 = scmp.ne.s32.totalorder %s100, %s101
      %p113 = scmp.eq.s32.totalorder %s28, 1
      %p114 = por %p112, %p113
      %p116 = scmp.ne.s32.totalorder %s101, %s115
      %p117 = scmp.eq.s32.totalorder %s28, 0
      %p118 = por %p116, %p117
      %s120 = sadd.s32 %s119, 1
      %p123 = scmp.eq.s32.totalorder %s22, 1
      %p124 = scmp.ne.s32.totalorder %s119, %s121
      %p125 = scmp.eq.s32.totalorder %s22, 0
      %p126 = por %p124, %p125
      %p127 = scmp.ne.s32.totalorder %s119, %s121
      %p128 = scmp.eq.s32.totalorder %s27, 1
      %p129 = por %p127, %p128
      %p130 = scmp.ne.s32.totalorder %s121, %s122
      %p131 = scmp.eq.s32.totalorder %s27, 0
      %p132 = por %p130, %p131
      %p133 = scmp.ne.s32.totalorder %s121, %s122
      %p134 = scmp.eq.s32.totalorder %s28, 1
      %p135 = por %p133, %p134
      %p137 = scmp.ne.s32.totalorder %s122, %s136
      %p138 = scmp.eq.s32.totalorder %s28, 0
      %p139 = por %p137, %p138
      %s141 = sadd.s32 %s140, 1
      %p144 = scmp.eq.s32.totalorder %s22, 1
      %p145 = scmp.ne.s32.totalorder %s140, %s142
      %p146 = scmp.eq.s32.totalorder %s22, 0
      %p147 = por %p145, %p146
      %p148 = scmp.ne.s32.totalorder %s140, %s142
      %p149 = scmp.eq.s32.totalorder %s27, 1
      %p150 = por %p148, %p149
      %p151 = scmp.ne.s32.totalorder %s142, %s143
      %p152 = scmp.eq.s32.totalorder %s27, 0
      %p153 = por %p151, %p152
      %p154 = scmp.ne.s32.totalorder %s142, %s143
      %p155 = scmp.eq.s32.totalorder %s28, 1
      %p156 = por %p154, %p155
      %p158 = scmp.ne.s32.totalorder %s143, %s157
      %p159 = scmp.eq.s32.totalorder %s28, 0
      %p160 = por %p158, %p159
      %s162 = sadd.s32 %s161, 1
      %p165 = scmp.eq.s32.totalorder %s22, 1
      %p166 = scmp.ne.s32.totalorder %s161, %s163
      %p167 = scmp.eq.s32.totalorder %s22, 0
      %p168 = por %p166, %p167
      %p169 = scmp.ne.s32.totalorder %s161, %s163
      %p170 = scmp.eq.s32.totalorder %s27, 1
      %p171 = por %p169, %p170
      %p172 = scmp.ne.s32.totalorder %s163, %s164
      %p173 = scmp.eq.s32.totalorder %s27, 0
      %p174 = por %p172, %p173
      %p175 = scmp.ne.s32.totalorder %s163, %s164
      %p176 = scmp.eq.s32.totalorder %s28, 1
      %p177 = por %p175, %p176
      %p179 = scmp.ne.s32.totalorder %s164, %s178
      %p180 = scmp.eq.s32.totalorder %s28, 0
      %p181 = por %p179, %p180
      %s183 = sadd.s32 %s182, 1
      %p186 = scmp.eq.s32.totalorder %s22, 1
      %p187 = scmp.ne.s32.totalorder %s182, %s184
      %p188 = scmp.eq.s32.totalorder %s22, 0
      %p189 = por %p187, %p188
      %p190 = scmp.ne.s32.totalorder %s182, %s184
      %p191 = scmp.eq.s32.totalorder %s27, 1
      %p192 = por %p190, %p191
      %p193 = scmp.ne.s32.totalorder %s184, %s185
      %p194 = scmp.eq.s32.totalorder %s27, 0
      %p195 = por %p193, %p194
      %p196 = scmp.ne.s32.totalorder %s184, %s185
      %p197 = scmp.eq.s32.totalorder %s28, 1
      %p198 = por %p196, %p197
      %p200 = scmp.ne.s32.totalorder %s185, %s199
      %p201 = scmp.eq.s32.totalorder %s28, 0
      %p202 = por %p200, %p201
      %s204 = sadd.s32 %s203, 1
      %p207 = scmp.eq.s32.totalorder %s22, 1
      %p208 = scmp.ne.s32.totalorder %s203, %s205
      %p209 = scmp.eq.s32.totalorder %s22, 0
      %p210 = por %p208, %p209
      %p211 = scmp.ne.s32.totalorder %s203, %s205
      %p212 = scmp.eq.s32.totalorder %s27, 1
      %p213 = por %p211, %p212
      %p214 = scmp.ne.s32.totalorder %s205, %s206
      %p215 = scmp.eq.s32.totalorder %s27, 0
      %p216 = por %p214, %p215
      %p217 = scmp.ne.s32.totalorder %s205, %s206
      %p218 = scmp.eq.s32.totalorder %s28, 1
      %p219 = por %p217, %p218
      %p221 = scmp.ne.s32.totalorder %s206, %s220
      %p222 = scmp.eq.s32.totalorder %s28, 0
      %p223 = por %p221, %p222
      %s224 = ssub.s32 %s22, %s29
      %p225 = scmp.eq.s32.totalorder %s224, 0
      %s227 = sadd.s32 %s226, 1
      %s228 = scalar_select %p225, %s226, %s227
      %p231 = pneg %p225
      %p232 = scmp.eq.s32.totalorder %s22, 1
      %p233 = por %p231, %p232
      %p234 = scmp.ne.s32.totalorder %s226, %s229
      %p235 = scmp.eq.s32.totalorder %s22, 0
      %p236 = por %p234, %p235
      %p237 = scmp.ne.s32.totalorder %s226, %s229
      %p238 = scmp.eq.s32.totalorder %s27, 1
      %p239 = por %p237, %p238
      %p240 = scmp.ne.s32.totalorder %s229, %s230
      %p241 = scmp.eq.s32.totalorder %s27, 0
      %p242 = por %p240, %p241
      %p243 = scmp.ne.s32.totalorder %s229, %s230
      %p244 = scmp.eq.s32.totalorder %s28, 1
      %p245 = por %p243, %p244
      %p247 = scmp.ne.s32.totalorder %s230, %s246
      %p248 = scmp.eq.s32.totalorder %s28, 0
      %p249 = por %p247, %p248
      %p250 = scmp.le.s32.totalorder 1, %s22
      %p251 = scmp.lt.s32.totalorder %s22, 3
      %p252 = pnand %p250, %p251
      %p253 = pneg %p252
      // Predicated region
      $region9: #{tpu_custom_call.1} parent=5 // pred_check
        _
      $region10: #{tpu_custom_call.1} parent=5 // pred_check_branch
        %255 = sbr.rel (%p252) target = $region12
      $region11: #{tpu_custom_call.1} parent=5 // pred_region
        %s256 = ssub.s32 %s22, 1
        // Predicated region
        $region13: #{tpu_custom_call.1} parent=11 // pred_check
          %p257 = pneg %p69
        $region14: #{tpu_custom_call.1} parent=11 // pred_check_branch
          %259 = sbr.rel (%p257) target = $region16
        $region15: #{tpu_custom_call.1} parent=11 // pred_region
          %s261 = ssub.s32 1024, 1024
          %262 = vsyncadd [#allocation6], %s261
          %s263 = sshll.u32 [#allocation5], 4
          %s264 = int_to_ptr.vmem [resolvable:$true] %s263
          %269 = dma.hbm_to_vmem [thread:$0]  %s1, 1024, %s264, [#allocation6], 64, 64, 4
        $region16: #{tpu_custom_call.1} parent=11 // pred_fallthru
          _
        // Predicated region
        $region17: #{tpu_custom_call.1} parent=11 // pred_check
          %p270 = pneg %p90
        $region18: #{tpu_custom_call.1} parent=11 // pred_check_branch
          %272 = sbr.rel (%p270) target = $region20
        $region19: #{tpu_custom_call.1} parent=11 // pred_region
          _
        $region20: #{tpu_custom_call.1} parent=11 // pred_fallthru
          _
        // Predicated region
        $region21: #{tpu_custom_call.1} parent=11 // pred_check
          %p273 = pneg %p111
        $region22: #{tpu_custom_call.1} parent=11 // pred_check_branch
          %275 = sbr.rel (%p273) target = $region24
        $region23: #{tpu_custom_call.1} parent=11 // pred_region
          %s277 = ssub.s32 2048, 2048
          %278 = vsyncadd [#allocation6], %s277
          %s279 = sshll.u32 [#allocation7], 4
          %s280 = int_to_ptr.vmem [resolvable:$true] %s279
          %285 = dma.hbm_to_vmem [thread:$0]  %s3, 2048, %s280, [#allocation6], 128, 128, 8
        $region24: #{tpu_custom_call.1} parent=11 // pred_fallthru
          _
        // Predicated region
        $region25: #{tpu_custom_call.1} parent=11 // pred_check
          %p286 = pneg %p132
        $region26: #{tpu_custom_call.1} parent=11 // pred_check_branch
          %288 = sbr.rel (%p286) target = $region28
        $region27: #{tpu_custom_call.1} parent=11 // pred_region
          _
        $region28: #{tpu_custom_call.1} parent=11 // pred_fallthru
          _
        // Predicated region
        $region29: #{tpu_custom_call.1} parent=11 // pred_check
          %p289 = pneg %p153
        $region30: #{tpu_custom_call.1} parent=11 // pred_check_branch
          %291 = sbr.rel (%p289) target = $region32
        $region31: #{tpu_custom_call.1} parent=11 // pred_region
          %s293 = ssub.s32 2048, 2048
          %294 = vsyncadd [#allocation9], %s293
          %s295 = sshll.u32 [#allocation8], 4
          %s296 = int_to_ptr.vmem [resolvable:$true] %s295
          %301 = dma.hbm_to_vmem [thread:$0]  %s5, 2048, %s296, [#allocation9], 64, 64, 4
        $region32: #{tpu_custom_call.1} parent=11 // pred_fallthru
          _
        // Predicated region
        $region33: #{tpu_custom_call.1} parent=11 // pred_check
          %p302 = pneg %p174
        $region34: #{tpu_custom_call.1} parent=11 // pred_check_branch
          %304 = sbr.rel (%p302) target = $region36
        $region35: #{tpu_custom_call.1} parent=11 // pred_region
          _
        $region36: #{tpu_custom_call.1} parent=11 // pred_fallthru
          _
        // Predicated region
        $region37: #{tpu_custom_call.1} parent=11 // pred_check
          %p305 = pneg %p195
        $region38: #{tpu_custom_call.1} parent=11 // pred_check_branch
          %307 = sbr.rel (%p305) target = $region40
        $region39: #{tpu_custom_call.1} parent=11 // pred_region
          _
        $region40: #{tpu_custom_call.1} parent=11 // pred_fallthru
          _
        // Predicated region
        $region41: #{tpu_custom_call.1} parent=11 // pred_check
          %p308 = pneg %p216
        $region42: #{tpu_custom_call.1} parent=11 // pred_check_branch
          %310 = sbr.rel (%p308) target = $region44
        $region43: #{tpu_custom_call.1} parent=11 // pred_region
          _
        $region44: #{tpu_custom_call.1} parent=11 // pred_fallthru
          _
      $region12: #{tpu_custom_call.1} parent=5 // pred_fallthru
        _
      %p311 = scmp.lt.s32.totalorder %s22, 2
      // Predicated region
      $region45: #{tpu_custom_call.1} parent=5 // pred_check
        %p312 = pneg %p311
      $region46: #{tpu_custom_call.1} parent=5 // pred_check_branch
        %314 = sbr.rel (%p312) target = $region48
      $region47: #{tpu_custom_call.1} parent=5 // pred_region
        // Predicated region
        $region49: #{tpu_custom_call.1} parent=47 // pred_check
          %p315 = pneg %p42
        $region50: #{tpu_custom_call.1} parent=47 // pred_check_branch
          %317 = sbr.rel (%p315) target = $region52
        $region51: #{tpu_custom_call.1} parent=47 // pred_region
          %s318 = sand.u32 %s32, 1
          %s319 = scalar_lea.sflag [#allocation4], %s318
          %s320 = sand.u32 %s32, 1
          %s321 = smul.addr %s320, 128
          %s322 = scalar_lea.vmem [#allocation3], %s321
          %s323 = smul.u32 16, %s22
          %s325 = ssub.s32 2048, 2048
          %326 = vsyncadd %s319, %s325
          %s327 = smul.addr %s323, 128
          %s328 = scalar_lea.hbm %s0, %s327
          %s329 = sshll.u32 %s322, 4
          %s330 = int_to_ptr.vmem [resolvable:$true] %s329
          %335 = dma.hbm_to_vmem [thread:$0]  %s328, 2048, %s330, %s319, 128, 128, 8
        $region52: #{tpu_custom_call.1} parent=47 // pred_fallthru
          _
      $region48: #{tpu_custom_call.1} parent=5 // pred_fallthru
        _
      %p336 = scmp.le.s32.totalorder 1, %s22
      %p337 = scmp.lt.s32.totalorder %s22, 3
      %p338 = pnand %p336, %p337
      %p339 = pneg %p338
      // Predicated region
      $region53: #{tpu_custom_call.1} parent=5 // pred_check
        _
      $region54: #{tpu_custom_call.1} parent=5 // pred_check_branch
        %341 = sbr.rel (%p338) target = $region56
      $region55: #{tpu_custom_call.1} parent=5 // pred_region
        %s342 = ssub.s32 %s22, 1
        %s343 = sand.u32 %s35, 1
        %s344 = scalar_lea.sflag [#allocation4], %s343
        %s345 = sand.u32 %s35, 1
        %s346 = smul.addr %s345, 128
        %s347 = scalar_lea.vmem [#allocation3], %s346
        // Predicated region
        $region57: #{tpu_custom_call.1} parent=55 // pred_check
          %p348 = pneg %p48
        $region58: #{tpu_custom_call.1} parent=55 // pred_check_branch
          %350 = sbr.rel (%p348) target = $region60
        $region59: #{tpu_custom_call.1} parent=55 // pred_region
          %351 = dma.done %s344, 2048
        $region60: #{tpu_custom_call.1} parent=55 // pred_fallthru
          _
        // Predicated region
        $region61: #{tpu_custom_call.1} parent=55 // pred_check
          %p352 = pneg %p69
        $region62: #{tpu_custom_call.1} parent=55 // pred_check_branch
          %354 = sbr.rel (%p352) target = $region64
        $region63: #{tpu_custom_call.1} parent=55 // pred_region
          %355 = dma.done [#allocation6], 1024
        $region64: #{tpu_custom_call.1} parent=55 // pred_fallthru
          _
        // Predicated region
        $region65: #{tpu_custom_call.1} parent=55 // pred_check
          %p356 = pneg %p111
        $region66: #{tpu_custom_call.1} parent=55 // pred_check_branch
          %358 = sbr.rel (%p356) target = $region68
        $region67: #{tpu_custom_call.1} parent=55 // pred_region
          %359 = dma.done [#allocation6], 2048
        $region68: #{tpu_custom_call.1} parent=55 // pred_fallthru
          _
        // Predicated region
        $region69: #{tpu_custom_call.1} parent=55 // pred_check
          %p360 = pneg %p153
        $region70: #{tpu_custom_call.1} parent=55 // pred_check_branch
          %362 = sbr.rel (%p360) target = $region72
        $region71: #{tpu_custom_call.1} parent=55 // pred_region
          %363 = dma.done [#allocation9], 2048
        $region72: #{tpu_custom_call.1} parent=55 // pred_fallthru
          _
        %s364 = sand.u32 %s35, 1
        %s365 = scalar_lea.sflag [#allocation4], %s364
        %s366 = sand.u32 %s35, 1
        %s367 = smul.addr %s366, 128
        %s368 = scalar_lea.vmem [#allocation3], %s367
        %p369 = pneg %p48
        %p370 = pneg %p45
        %p371 = pneg %p69
        %p372 = pneg %p66
        %p373 = pneg %p90
        %p374 = pneg %p87
        %p375 = pneg %p111
        %p376 = pneg %p108
        %p377 = pneg %p132
        %p378 = pneg %p129
        %p379 = pneg %p153
        %p380 = pneg %p150
        %p381 = pneg %p174
        %p382 = pneg %p171
        %p383 = pneg %p195
        %p384 = pneg %p192
        %p385 = pneg %p216
        %p386 = pneg %p213
        %p387 = pneg %p242
        %p388 = pneg %p239
        %s389 = smul.u32 16, %s27
        %p390 = scmp.lt.s32.totalorder %s389, 31
        %s391 = scalar_select %p390, %s389, 31
        %s392 = smul.addr %s391, 8
        %s393 = scalar_lea.vmem %s9, %s392
        %s394 = smul.u32 16, %s27
        %s395 = smul.u32 16, %s27
        %p396 = scmp.lt.s32.totalorder %s395, 31
        %s397 = scalar_select %p396, %s395, 31
        %s398 = smul.addr %s397, 8
        %s399 = scalar_lea.vmem %s9, %s398
        %s400 = smul.u32 16, %s27
        %v402 = vld [vmem:[%s347] sm:$0xff]
        %v403 = vld [vmem:[%s347 + $0x8] sm:$0xff]
        %v404 = vld [vmem:[%s347 + $0x10] sm:$0xff]
        %v405 = vld [vmem:[%s347 + $0x18] sm:$0xff]
        %v406 = vld [vmem:[%s347 + $0x20] sm:$0xff]
        %v407 = vld [vmem:[%s347 + $0x28] sm:$0xff]
        %v408 = vld [vmem:[%s347 + $0x30] sm:$0xff]
        %v409 = vld [vmem:[%s347 + $0x38] sm:$0xff]
        %v410 = vld [vmem:[%s347 + $0x40] sm:$0xff]
        %v411 = vld [vmem:[%s347 + $0x48] sm:$0xff]
        %v412 = vld [vmem:[%s347 + $0x50] sm:$0xff]
        %v413 = vld [vmem:[%s347 + $0x58] sm:$0xff]
        %v414 = vld [vmem:[%s347 + $0x60] sm:$0xff]
        %v415 = vld [vmem:[%s347 + $0x68] sm:$0xff]
        %v416 = vld [vmem:[%s347 + $0x70] sm:$0xff]
        %v417 = vld [vmem:[%s347 + $0x78] sm:$0xff]
        %v418 = vpack.c.bf16 %v403, %v402
        %v419 = vpack.c.bf16 %v405, %v404
        %v420 = vpack.c.bf16 %v407, %v406
        %v421 = vpack.c.bf16 %v409, %v408
        %v422 = vpack.c.bf16 %v411, %v410
        %v423 = vpack.c.bf16 %v413, %v412
        %v424 = vpack.c.bf16 %v415, %v414
        %v425 = vpack.c.bf16 %v417, %v416
        %v426 = vld [vmem:[#allocation5] sm:$0xf]
        %v427 = vld [vmem:[#allocation5 + $0x4] sm:$0xf]
        %v428 = vld [vmem:[#allocation5 + $0x8] sm:$0xf]
        %v429 = vld [vmem:[#allocation5 + $0xc] sm:$0xf]
        %v430 = vld [vmem:[#allocation5 + $0x10] sm:$0xf]
        %v431 = vld [vmem:[#allocation5 + $0x14] sm:$0xf]
        %v432 = vld [vmem:[#allocation5 + $0x18] sm:$0xf]
        %v433 = vld [vmem:[#allocation5 + $0x1c] sm:$0xf]
        %v434 = vld [vmem:[#allocation5 + $0x20] sm:$0xf]
        %v435 = vld [vmem:[#allocation5 + $0x24] sm:$0xf]
        %v436 = vld [vmem:[#allocation5 + $0x28] sm:$0xf]
        %v437 = vld [vmem:[#allocation5 + $0x2c] sm:$0xf]
        %v438 = vld [vmem:[#allocation5 + $0x30] sm:$0xf]
        %v439 = vld [vmem:[#allocation5 + $0x34] sm:$0xf]
        %v440 = vld [vmem:[#allocation5 + $0x38] sm:$0xf]
        %v441 = vld [vmem:[#allocation5 + $0x3c] sm:$0xf]
        %v442 = vld [vmem:[%s2] sm:$0x1]
        %v444 = vlaneseq
        %v445 = vshrl.u32 %v444, 7
        %v446 = vsub.s32 0, %v445
        %v447 = vrot.slane %v442, %v446
        %v465 = vunpack.c.l.b16 %v426
        %v466 = vunpack.c.l.b16 %v427
        %v467 = vunpack.c.l.b16 %v428
        %v468 = vunpack.c.l.b16 %v429
        %v469 = vunpack.c.l.b16 %v430
        %v470 = vunpack.c.l.b16 %v431
        %v471 = vunpack.c.l.b16 %v432
        %v472 = vunpack.c.l.b16 %v433
        %v473 = vunpack.c.l.b16 %v434
        %v474 = vunpack.c.l.b16 %v435
        %v475 = vunpack.c.l.b16 %v436
        %v476 = vunpack.c.l.b16 %v437
        %v477 = vunpack.c.l.b16 %v438
        %v478 = vunpack.c.l.b16 %v439
        %v479 = vunpack.c.l.b16 %v440
        %v480 = vunpack.c.l.b16 %v441
        %v481 = vpack.c.b16 %v466, %v465
        %v482 = vpack.c.b16 %v468, %v467
        %v483 = vpack.c.b16 %v470, %v469
        %v484 = vpack.c.b16 %v472, %v471
        %v485 = vpack.c.b16 %v474, %v473
        %v486 = vpack.c.b16 %v476, %v475
        %v487 = vpack.c.b16 %v478, %v477
        %v488 = vpack.c.b16 %v480, %v479
        %497 = vmatprep.subr.bf16.mxu0 0
        %498 = vmatpush1.bf16.msra.mxu0 %v481
        %499 = vmatprep.subr.bf16.mxu0 0
        %500 = vmatpush1.bf16.msra.mxu0 %v482
        %501 = vmatprep.subr.bf16.mxu0 0
        %502 = vmatpush1.bf16.msra.mxu0 %v483
        %503 = vmatprep.subr.bf16.mxu0 0
        %504 = vmatpush1.bf16.msra.mxu0 %v484
        %505 = vmatprep.subr.bf16.mxu0 0
        %506 = vmatpush1.bf16.msra.mxu0 %v485
        %507 = vmatprep.subr.bf16.mxu0 0
        %508 = vmatpush1.bf16.msra.mxu0 %v486
        %509 = vmatprep.subr.bf16.mxu0 0
        %510 = vmatpush1.bf16.msra.mxu0 %v487
        %511 = vmatprep.subr.bf16.mxu0 0
        %512 = vmatpush1.bf16.msra.mxu0 %v488
        %513 = vmatprep.subr.bf16.mxu0 0
        %514 = vmatpush1.bf16.msra.mxu0 0
        %515 = vmatprep.subr.bf16.mxu0 0
        %516 = vmatpush1.bf16.msra.mxu0 0
        %517 = vmatprep.subr.bf16.mxu0 0
        %518 = vmatpush1.bf16.msra.mxu0 0
        %519 = vmatprep.subr.bf16.mxu0 0
        %520 = vmatpush1.bf16.msra.mxu0 0
        %521 = vmatprep.subr.bf16.mxu0 0
        %522 = vmatpush1.bf16.msra.mxu0 0
        %523 = vmatprep.subr.bf16.mxu0 0
        %524 = vmatpush1.bf16.msra.mxu0 0
        %525 = vmatprep.subr.bf16.mxu0 0
        %526 = vmatpush1.bf16.msra.mxu0 0
        %527 = vmatprep.subr.bf16.mxu0 0
        %528 = vmatpush1.bf16.msra.mxu0 0
        %529 = vmatprep.mubr.bf16.mxu0 0
        %530 = vmatmul.mubr.bf16.gmra.mrb[0].mxu0 %v418
        %v531 = vpop.f32.mrb[0].mxu0
        %v532 = vadd.f32 %v447, %v531
        %v533 = vpop.f32.mrb[0].mxu0
        %v534 = vpop.f32.mrb[0].mxu0
        %v535 = vadd.f32 %v447, %v534
        %v536 = vpop.f32.mrb[0].mxu0
        %537 = vmatprep.mubr.bf16.mxu0 0
        %538 = vmatmul.mubr.bf16.gmra.mrb[0].mxu0 %v419
        %v539 = vpop.f32.mrb[0].mxu0
        %v540 = vadd.f32 %v447, %v539
        %v541 = vpop.f32.mrb[0].mxu0
        %v542 = vpop.f32.mrb[0].mxu0
        %v543 = vadd.f32 %v447, %v542
        %v544 = vpop.f32.mrb[0].mxu0
        %545 = vmatprep.mubr.bf16.mxu0 0
        %546 = vmatmul.mubr.bf16.gmra.mrb[0].mxu0 %v420
        %v547 = vpop.f32.mrb[0].mxu0
        %v548 = vadd.f32 %v447, %v547
        %v549 = vpop.f32.mrb[0].mxu0
        %v550 = vpop.f32.mrb[0].mxu0
        %v551 = vadd.f32 %v447, %v550
        %v552 = vpop.f32.mrb[0].mxu0
        %553 = vmatprep.mubr.bf16.mxu0 0
        %554 = vmatmul.mubr.bf16.gmra.mrb[0].mxu0 %v421
        %v555 = vpop.f32.mrb[0].mxu0
        %v556 = vadd.f32 %v447, %v555
        %v557 = vpop.f32.mrb[0].mxu0
        %v558 = vpop.f32.mrb[0].mxu0
        %v559 = vadd.f32 %v447, %v558
        %v560 = vpop.f32.mrb[0].mxu0
        %561 = vmatprep.mubr.bf16.mxu0 0
        %562 = vmatmul.mubr.bf16.gmra.mrb[0].mxu0 %v422
        %v563 = vpop.f32.mrb[0].mxu0
        %v564 = vadd.f32 %v447, %v563
        %v565 = vpop.f32.mrb[0].mxu0
        %v566 = vpop.f32.mrb[0].mxu0
        %v567 = vadd.f32 %v447, %v566
        %v568 = vpop.f32.mrb[0].mxu0
        %569 = vmatprep.mubr.bf16.mxu0 0
        %570 = vmatmul.mubr.bf16.gmra.mrb[0].mxu0 %v423
        %v571 = vpop.f32.mrb[0].mxu0
        %v572 = vadd.f32 %v447, %v571
        %v573 = vpop.f32.mrb[0].mxu0
        %v574 = vpop.f32.mrb[0].mxu0
        %v575 = vadd.f32 %v447, %v574
        %v576 = vpop.f32.mrb[0].mxu0
        %577 = vmatprep.mubr.bf16.mxu0 0
        %578 = vmatmul.mubr.bf16.gmra.mrb[0].mxu0 %v424
        %v579 = vpop.f32.mrb[0].mxu0
        %v580 = vadd.f32 %v447, %v579
        %v581 = vpop.f32.mrb[0].mxu0
        %v582 = vpop.f32.mrb[0].mxu0
        %v583 = vadd.f32 %v447, %v582
        %v584 = vpop.f32.mrb[0].mxu0
        %585 = vmatprep.mubr.bf16.mxu0 0
        %586 = vmatmul.mubr.bf16.gmra.mrb[0].mxu0 %v425
        %v587 = vpop.f32.mrb[0].mxu0
        %v588 = vadd.f32 %v447, %v587
        %v589 = vpop.f32.mrb[0].mxu0
        %v590 = vpop.f32.mrb[0].mxu0
        %v591 = vadd.f32 %v447, %v590
        %v592 = vpop.f32.mrb[0].mxu0
        %593 = vdwg.mxu0
        %v594 = vmax.f32 %v532, 0.0
        %v595 = vmax.f32 %v535, 0.0
        %v596 = vmax.f32 %v540, 0.0
        %v597 = vmax.f32 %v543, 0.0
        %v598 = vmax.f32 %v548, 0.0
        %v599 = vmax.f32 %v551, 0.0
        %v600 = vmax.f32 %v556, 0.0
        %v601 = vmax.f32 %v559, 0.0
        %v602 = vmax.f32 %v564, 0.0
        %v603 = vmax.f32 %v567, 0.0
        %v604 = vmax.f32 %v572, 0.0
        %v605 = vmax.f32 %v575, 0.0
        %v606 = vmax.f32 %v580, 0.0
        %v607 = vmax.f32 %v583, 0.0
        %v608 = vmax.f32 %v588, 0.0
        %v609 = vmax.f32 %v591, 0.0
        %v610 = vpack.c.bf16 %v595, %v594
        %v611 = vpack.c.bf16 %v597, %v596
        %v612 = vpack.c.bf16 %v599, %v598
        %v613 = vpack.c.bf16 %v601, %v600
        %v614 = vpack.c.bf16 %v603, %v602
        %v615 = vpack.c.bf16 %v605, %v604
        %v616 = vpack.c.bf16 %v607, %v606
        %v617 = vpack.c.bf16 %v609, %v608
        %v618 = vld [vmem:[#allocation7] sm:$0xff]
        %v619 = vld [vmem:[#allocation7 + $0x8] sm:$0xff]
        %v620 = vld [vmem:[#allocation7 + $0x10] sm:$0xff]
        %v621 = vld [vmem:[#allocation7 + $0x18] sm:$0xff]
        %v622 = vld [vmem:[#allocation7 + $0x20] sm:$0xff]
        %v623 = vld [vmem:[#allocation7 + $0x28] sm:$0xff]
        %v624 = vld [vmem:[#allocation7 + $0x30] sm:$0xff]
        %v625 = vld [vmem:[#allocation7 + $0x38] sm:$0xff]
        %v626 = vld [vmem:[#allocation7 + $0x40] sm:$0xff]
        %v627 = vld [vmem:[#allocation7 + $0x48] sm:$0xff]
        %v628 = vld [vmem:[#allocation7 + $0x50] sm:$0xff]
        %v629 = vld [vmem:[#allocation7 + $0x58] sm:$0xff]
        %v630 = vld [vmem:[#allocation7 + $0x60] sm:$0xff]
        %v631 = vld [vmem:[#allocation7 + $0x68] sm:$0xff]
        %v632 = vld [vmem:[#allocation7 + $0x70] sm:$0xff]
        %v633 = vld [vmem:[#allocation7 + $0x78] sm:$0xff]
        %v634 = vld [vmem:[%s4] sm:$0x3]
        %v636 = vlaneseq
        %v637 = vshrl.u32 %v636, 7
        %v638 = vsub.s32 0, %v637
        %v639 = vrot.slane %v634, %v638
        %v640 = vlaneseq
        %v641 = vshrl.u32 %v640, 7
        %v642 = vsub.s32 1, %v641
        %v643 = vrot.slane %v634, %v642
        %v662 = vunpack.c.l.b16 %v618
        %v663 = vunpack.c.h.b16 %v618
        %v664 = vunpack.c.l.b16 %v619
        %v665 = vunpack.c.h.b16 %v619
        %v666 = vunpack.c.l.b16 %v620
        %v667 = vunpack.c.h.b16 %v620
        %v668 = vunpack.c.l.b16 %v621
        %v669 = vunpack.c.h.b16 %v621
        %v670 = vunpack.c.l.b16 %v622
        %v671 = vunpack.c.h.b16 %v622
        %v672 = vunpack.c.l.b16 %v623
        %v673 = vunpack.c.h.b16 %v623
        %v674 = vunpack.c.l.b16 %v624
        %v675 = vunpack.c.h.b16 %v624
        %v676 = vunpack.c.l.b16 %v625
        %v677 = vunpack.c.h.b16 %v625
        %v678 = vunpack.c.l.b16 %v626
        %v679 = vunpack.c.h.b16 %v626
        %v680 = vunpack.c.l.b16 %v627
        %v681 = vunpack.c.h.b16 %v627
        %v682 = vunpack.c.l.b16 %v628
        %v683 = vunpack.c.h.b16 %v628
        %v684 = vunpack.c.l.b16 %v629
        %v685 = vunpack.c.h.b16 %v629
        %v686 = vunpack.c.l.b16 %v630
        %v687 = vunpack.c.h.b16 %v630
        %v688 = vunpack.c.l.b16 %v631
        %v689 = vunpack.c.h.b16 %v631
        %v690 = vunpack.c.l.b16 %v632
        %v691 = vunpack.c.h.b16 %v632
        %v692 = vunpack.c.l.b16 %v633
        %v693 = vunpack.c.h.b16 %v633
        %v694 = vpack.c.b16 %v664, %v662
        %v695 = vpack.c.b16 %v665, %v663
        %v696 = vpack.c.b16 %v668, %v666
        %v697 = vpack.c.b16 %v669, %v667
        %v698 = vpack.c.b16 %v672, %v670
        %v699 = vpack.c.b16 %v673, %v671
        %v700 = vpack.c.b16 %v676, %v674
        %v701 = vpack.c.b16 %v677, %v675
        %v702 = vpack.c.b16 %v680, %v678
        %v703 = vpack.c.b16 %v681, %v679
        %v704 = vpack.c.b16 %v684, %v682
        %v705 = vpack.c.b16 %v685, %v683
        %v706 = vpack.c.b16 %v688, %v686
        %v707 = vpack.c.b16 %v689, %v687
        %v708 = vpack.c.b16 %v692, %v690
        %v709 = vpack.c.b16 %v693, %v691
        %726 = vmatprep.subr.bf16.mxu0 %v695
        %727 = vmatpush1.bf16.msra.mxu0 %v694
        %728 = vmatprep.subr.bf16.mxu0 %v697
        %729 = vmatpush1.bf16.msra.mxu0 %v696
        %730 = vmatprep.subr.bf16.mxu0 %v699
        %731 = vmatpush1.bf16.msra.mxu0 %v698
        %732 = vmatprep.subr.bf16.mxu0 %v701
        %733 = vmatpush1.bf16.msra.mxu0 %v700
        %734 = vmatprep.subr.bf16.mxu0 %v703
        %735 = vmatpush1.bf16.msra.mxu0 %v702
        %736 = vmatprep.subr.bf16.mxu0 %v705
        %737 = vmatpush1.bf16.msra.mxu0 %v704
        %738 = vmatprep.subr.bf16.mxu0 %v707
        %739 = vmatpush1.bf16.msra.mxu0 %v706
        %740 = vmatprep.subr.bf16.mxu0 %v709
        %741 = vmatpush1.bf16.msra.mxu0 %v708
        %742 = vmatprep.subr.bf16.mxu0 0
        %743 = vmatpush1.bf16.msra.mxu0 0
        %744 = vmatprep.subr.bf16.mxu0 0
        %745 = vmatpush1.bf16.msra.mxu0 0
        %746 = vmatprep.subr.bf16.mxu0 0
        %747 = vmatpush1.bf16.msra.mxu0 0
        %748 = vmatprep.subr.bf16.mxu0 0
        %749 = vmatpush1.bf16.msra.mxu0 0
        %750 = vmatprep.subr.bf16.mxu0 0
        %751 = vmatpush1.bf16.msra.mxu0 0
        %752 = vmatprep.subr.bf16.mxu0 0
        %753 = vmatpush1.bf16.msra.mxu0 0
        %754 = vmatprep.subr.bf16.mxu0 0
        %755 = vmatpush1.bf16.msra.mxu0 0
        %756 = vmatprep.subr.bf16.mxu0 0
        %757 = vmatpush1.bf16.msra.mxu0 0
        %758 = vmatprep.mubr.bf16.mxu0 0
        %759 = vmatmul.mubr.bf16.gmra.mrb[0].mxu0 %v610
        %v760 = vpop.f32.mrb[0].mxu0
        %v761 = vadd.f32 %v639, %v760
        %v762 = vpop.f32.mrb[0].mxu0
        %v763 = vadd.f32 %v643, %v762
        %v764 = vpop.f32.mrb[0].mxu0
        %v765 = vadd.f32 %v639, %v764
        %v766 = vpop.f32.mrb[0].mxu0
        %v767 = vadd.f32 %v643, %v766
        %768 = vmatprep.mubr.bf16.mxu0 0
        %769 = vmatmul.mubr.bf16.gmra.mrb[0].mxu0 %v611
        %v770 = vpop.f32.mrb[0].mxu0
        %v771 = vadd.f32 %v639, %v770
        %v772 = vpop.f32.mrb[0].mxu0
        %v773 = vadd.f32 %v643, %v772
        %v774 = vpop.f32.mrb[0].mxu0
        %v775 = vadd.f32 %v639, %v774
        %v776 = vpop.f32.mrb[0].mxu0
        %v777 = vadd.f32 %v643, %v776
        %778 = vmatprep.mubr.bf16.mxu0 0
        %779 = vmatmul.mubr.bf16.gmra.mrb[0].mxu0 %v612
        %v780 = vpop.f32.mrb[0].mxu0
        %v781 = vadd.f32 %v639, %v780
        %v782 = vpop.f32.mrb[0].mxu0
        %v783 = vadd.f32 %v643, %v782
        %v784 = vpop.f32.mrb[0].mxu0
        %v785 = vadd.f32 %v639, %v784
        %v786 = vpop.f32.mrb[0].mxu0
        %v787 = vadd.f32 %v643, %v786
        %788 = vmatprep.mubr.bf16.mxu0 0
        %789 = vmatmul.mubr.bf16.gmra.mrb[0].mxu0 %v613
        %v790 = vpop.f32.mrb[0].mxu0
        %v791 = vadd.f32 %v639, %v790
        %v792 = vpop.f32.mrb[0].mxu0
        %v793 = vadd.f32 %v643, %v792
        %v794 = vpop.f32.mrb[0].mxu0
        %v795 = vadd.f32 %v639, %v794
        %v796 = vpop.f32.mrb[0].mxu0
        %v797 = vadd.f32 %v643, %v796
        %798 = vmatprep.mubr.bf16.mxu0 0
        %799 = vmatmul.mubr.bf16.gmra.mrb[0].mxu0 %v614
        %v800 = vpop.f32.mrb[0].mxu0
        %v801 = vadd.f32 %v639, %v800
        %v802 = vpop.f32.mrb[0].mxu0
        %v803 = vadd.f32 %v643, %v802
        %v804 = vpop.f32.mrb[0].mxu0
        %v805 = vadd.f32 %v639, %v804
        %v806 = vpop.f32.mrb[0].mxu0
        %v807 = vadd.f32 %v643, %v806
        %808 = vmatprep.mubr.bf16.mxu0 0
        %809 = vmatmul.mubr.bf16.gmra.mrb[0].mxu0 %v615
        %v810 = vpop.f32.mrb[0].mxu0
        %v811 = vadd.f32 %v639, %v810
        %v812 = vpop.f32.mrb[0].mxu0
        %v813 = vadd.f32 %v643, %v812
        %v814 = vpop.f32.mrb[0].mxu0
        %v815 = vadd.f32 %v639, %v814
        %v816 = vpop.f32.mrb[0].mxu0
        %v817 = vadd.f32 %v643, %v816
        %818 = vmatprep.mubr.bf16.mxu0 0
        %819 = vmatmul.mubr.bf16.gmra.mrb[0].mxu0 %v616
        %v820 = vpop.f32.mrb[0].mxu0
        %v821 = vadd.f32 %v639, %v820
        %v822 = vpop.f32.mrb[0].mxu0
        %v823 = vadd.f32 %v643, %v822
        %v824 = vpop.f32.mrb[0].mxu0
        %v825 = vadd.f32 %v639, %v824
        %v826 = vpop.f32.mrb[0].mxu0
        %v827 = vadd.f32 %v643, %v826
        %828 = vmatprep.mubr.bf16.mxu0 0
        %829 = vmatmul.mubr.bf16.gmra.mrb[0].mxu0 %v617
        %v830 = vpop.f32.mrb[0].mxu0
        %v831 = vadd.f32 %v639, %v830
        %v832 = vpop.f32.mrb[0].mxu0
        %v833 = vadd.f32 %v643, %v832
        %v834 = vpop.f32.mrb[0].mxu0
        %v835 = vadd.f32 %v639, %v834
        %v836 = vpop.f32.mrb[0].mxu0
        %v837 = vadd.f32 %v643, %v836
        %838 = vdwg.mxu0
        %v839 = vpack.c.bf16 %v765, %v761
        %v840 = vpack.c.bf16 %v767, %v763
        %v841 = vpack.c.bf16 %v775, %v771
        %v842 = vpack.c.bf16 %v777, %v773
        %v843 = vpack.c.bf16 %v785, %v781
        %v844 = vpack.c.bf16 %v787, %v783
        %v845 = vpack.c.bf16 %v795, %v791
        %v846 = vpack.c.bf16 %v797, %v793
        %v847 = vpack.c.bf16 %v805, %v801
        %v848 = vpack.c.bf16 %v807, %v803
        %v849 = vpack.c.bf16 %v815, %v811
        %v850 = vpack.c.bf16 %v817, %v813
        %v851 = vpack.c.bf16 %v825, %v821
        %v852 = vpack.c.bf16 %v827, %v823
        %v853 = vpack.c.bf16 %v835, %v831
        %v854 = vpack.c.bf16 %v837, %v833
        %v855 = vld [vmem:[#allocation8] sm:$0xf]
        %v856 = vld [vmem:[#allocation8 + $0x4] sm:$0xf]
        %v857 = vld [vmem:[#allocation8 + $0x8] sm:$0xf]
        %v858 = vld [vmem:[#allocation8 + $0xc] sm:$0xf]
        %v859 = vld [vmem:[#allocation8 + $0x10] sm:$0xf]
        %v860 = vld [vmem:[#allocation8 + $0x14] sm:$0xf]
        %v861 = vld [vmem:[#allocation8 + $0x18] sm:$0xf]
        %v862 = vld [vmem:[#allocation8 + $0x1c] sm:$0xf]
        %v863 = vld [vmem:[#allocation8 + $0x20] sm:$0xf]
        %v864 = vld [vmem:[#allocation8 + $0x24] sm:$0xf]
        %v865 = vld [vmem:[#allocation8 + $0x28] sm:$0xf]
        %v866 = vld [vmem:[#allocation8 + $0x2c] sm:$0xf]
        %v867 = vld [vmem:[#allocation8 + $0x30] sm:$0xf]
        %v868 = vld [vmem:[#allocation8 + $0x34] sm:$0xf]
        %v869 = vld [vmem:[#allocation8 + $0x38] sm:$0xf]
        %v870 = vld [vmem:[#allocation8 + $0x3c] sm:$0xf]
        %v871 = vld [vmem:[#allocation8 + $0x40] sm:$0xf]
        %v872 = vld [vmem:[#allocation8 + $0x44] sm:$0xf]
        %v873 = vld [vmem:[#allocation8 + $0x48] sm:$0xf]
        %v874 = vld [vmem:[#allocation8 + $0x4c] sm:$0xf]
        %v875 = vld [vmem:[#allocation8 + $0x50] sm:$0xf]
        %v876 = vld [vmem:[#allocation8 + $0x54] sm:$0xf]
        %v877 = vld [vmem:[#allocation8 + $0x58] sm:$0xf]
        %v878 = vld [vmem:[#allocation8 + $0x5c] sm:$0xf]
        %v879 = vld [vmem:[#allocation8 + $0x60] sm:$0xf]
        %v880 = vld [vmem:[#allocation8 + $0x64] sm:$0xf]
        %v881 = vld [vmem:[#allocation8 + $0x68] sm:$0xf]
        %v882 = vld [vmem:[#allocation8 + $0x6c] sm:$0xf]
        %v883 = vld [vmem:[#allocation8 + $0x70] sm:$0xf]
        %v884 = vld [vmem:[#allocation8 + $0x74] sm:$0xf]
        %v885 = vld [vmem:[#allocation8 + $0x78] sm:$0xf]
        %v886 = vld [vmem:[#allocation8 + $0x7c] sm:$0xf]
        %v887 = vld [vmem:[%s6] sm:$0x1]
        %v889 = vlaneseq
        %v890 = vshrl.u32 %v889, 7
        %v891 = vsub.s32 0, %v890
        %v892 = vrot.slane %v887, %v891
        %v926 = vunpack.c.l.b16 %v855
        %v927 = vunpack.c.l.b16 %v856
        %v928 = vunpack.c.l.b16 %v857
        %v929 = vunpack.c.l.b16 %v858
        %v930 = vunpack.c.l.b16 %v859
        %v931 = vunpack.c.l.b16 %v860
        %v932 = vunpack.c.l.b16 %v861
        %v933 = vunpack.c.l.b16 %v862
        %v934 = vunpack.c.l.b16 %v863
        %v935 = vunpack.c.l.b16 %v864
        %v936 = vunpack.c.l.b16 %v865
        %v937 = vunpack.c.l.b16 %v866
        %v938 = vunpack.c.l.b16 %v867
        %v939 = vunpack.c.l.b16 %v868
        %v940 = vunpack.c.l.b16 %v869
        %v941 = vunpack.c.l.b16 %v870
        %v942 = vunpack.c.l.b16 %v871
        %v943 = vunpack.c.l.b16 %v872
        %v944 = vunpack.c.l.b16 %v873
        %v945 = vunpack.c.l.b16 %v874
        %v946 = vunpack.c.l.b16 %v875
        %v947 = vunpack.c.l.b16 %v876
        %v948 = vunpack.c.l.b16 %v877
        %v949 = vunpack.c.l.b16 %v878
        %v950 = vunpack.c.l.b16 %v879
        %v951 = vunpack.c.l.b16 %v880
        %v952 = vunpack.c.l.b16 %v881
        %v953 = vunpack.c.l.b16 %v882
        %v954 = vunpack.c.l.b16 %v883
        %v955 = vunpack.c.l.b16 %v884
        %v956 = vunpack.c.l.b16 %v885
        %v957 = vunpack.c.l.b16 %v886
        %v958 = vpack.c.b16 %v927, %v926
        %v959 = vpack.c.b16 %v929, %v928
        %v960 = vpack.c.b16 %v931, %v930
        %v961 = vpack.c.b16 %v933, %v932
        %v962 = vpack.c.b16 %v935, %v934
        %v963 = vpack.c.b16 %v937, %v936
        %v964 = vpack.c.b16 %v939, %v938
        %v965 = vpack.c.b16 %v941, %v940
        %v966 = vpack.c.b16 %v943, %v942
        %v967 = vpack.c.b16 %v945, %v944
        %v968 = vpack.c.b16 %v947, %v946
        %v969 = vpack.c.b16 %v949, %v948
        %v970 = vpack.c.b16 %v951, %v950
        %v971 = vpack.c.b16 %v953, %v952
        %v972 = vpack.c.b16 %v955, %v954
        %v973 = vpack.c.b16 %v957, %v956
        %990 = vmatprep.subr.bf16.mxu0 0
        %991 = vmatpush1.bf16.msra.mxu0 %v958
        %992 = vmatprep.subr.bf16.mxu0 0
        %993 = vmatpush1.bf16.msra.mxu0 %v959
        %994 = vmatprep.subr.bf16.mxu0 0
        %995 = vmatpush1.bf16.msra.mxu0 %v960
        %996 = vmatprep.subr.bf16.mxu0 0
        %997 = vmatpush1.bf16.msra.mxu0 %v961
        %998 = vmatprep.subr.bf16.mxu0 0
        %999 = vmatpush1.bf16.msra.mxu0 %v962
        %1000 = vmatprep.subr.bf16.mxu0 0
        %1001 = vmatpush1.bf16.msra.mxu0 %v963
        %1002 = vmatprep.subr.bf16.mxu0 0
        %1003 = vmatpush1.bf16.msra.mxu0 %v964
        %1004 = vmatprep.subr.bf16.mxu0 0
        %1005 = vmatpush1.bf16.msra.mxu0 %v965
        %1006 = vmatprep.subr.bf16.mxu0 0
        %1007 = vmatpush1.bf16.msra.mxu0 %v966
        %1008 = vmatprep.subr.bf16.mxu0 0
        %1009 = vmatpush1.bf16.msra.mxu0 %v967
        %1010 = vmatprep.subr.bf16.mxu0 0
        %1011 = vmatpush1.bf16.msra.mxu0 %v968
        %1012 = vmatprep.subr.bf16.mxu0 0
        %1013 = vmatpush1.bf16.msra.mxu0 %v969
        %1014 = vmatprep.subr.bf16.mxu0 0
        %1015 = vmatpush1.bf16.msra.mxu0 %v970
        %1016 = vmatprep.subr.bf16.mxu0 0
        %1017 = vmatpush1.bf16.msra.mxu0 %v971
        %1018 = vmatprep.subr.bf16.mxu0 0
        %1019 = vmatpush1.bf16.msra.mxu0 %v972
        %1020 = vmatprep.subr.bf16.mxu0 0
        %1021 = vmatpush1.bf16.msra.mxu0 %v973
        %1022 = vmatprep.mubr.bf16.mxu0 %v840
        %1023 = vmatmul.mubr.bf16.gmra.mrb[0].mxu0 %v839
        %v1024 = vpop.f32.mrb[0].mxu0
        %v1025 = vadd.f32 %v892, %v1024
        %v1026 = vpop.f32.mrb[0].mxu0
        %v1027 = vpop.f32.mrb[0].mxu0
        %v1028 = vadd.f32 %v892, %v1027
        %v1029 = vpop.f32.mrb[0].mxu0
        %1030 = vmatprep.mubr.bf16.mxu0 %v842
        %1031 = vmatmul.mubr.bf16.gmra.mrb[0].mxu0 %v841
        %v1032 = vpop.f32.mrb[0].mxu0
        %v1033 = vadd.f32 %v892, %v1032
        %v1034 = vpop.f32.mrb[0].mxu0
        %v1035 = vpop.f32.mrb[0].mxu0
        %v1036 = vadd.f32 %v892, %v1035
        %v1037 = vpop.f32.mrb[0].mxu0
        %1038 = vmatprep.mubr.bf16.mxu0 %v844
        %1039 = vmatmul.mubr.bf16.gmra.mrb[0].mxu0 %v843
        %v1040 = vpop.f32.mrb[0].mxu0
        %v1041 = vadd.f32 %v892, %v1040
        %v1042 = vpop.f32.mrb[0].mxu0
        %v1043 = vpop.f32.mrb[0].mxu0
        %v1044 = vadd.f32 %v892, %v1043
        %v1045 = vpop.f32.mrb[0].mxu0
        %1046 = vmatprep.mubr.bf16.mxu0 %v846
        %1047 = vmatmul.mubr.bf16.gmra.mrb[0].mxu0 %v845
        %v1048 = vpop.f32.mrb[0].mxu0
        %v1049 = vadd.f32 %v892, %v1048
        %v1050 = vpop.f32.mrb[0].mxu0
        %v1051 = vpop.f32.mrb[0].mxu0
        %v1052 = vadd.f32 %v892, %v1051
        %v1053 = vpop.f32.mrb[0].mxu0
        %1054 = vmatprep.mubr.bf16.mxu0 %v848
        %1055 = vmatmul.mubr.bf16.gmra.mrb[0].mxu0 %v847
        %v1056 = vpop.f32.mrb[0].mxu0
        %v1057 = vadd.f32 %v892, %v1056
        %v1058 = vpop.f32.mrb[0].mxu0
        %v1059 = vpop.f32.mrb[0].mxu0
        %v1060 = vadd.f32 %v892, %v1059
        %v1061 = vpop.f32.mrb[0].mxu0
        %1062 = vmatprep.mubr.bf16.mxu0 %v850
        %1063 = vmatmul.mubr.bf16.gmra.mrb[0].mxu0 %v849
        %v1064 = vpop.f32.mrb[0].mxu0
        %v1065 = vadd.f32 %v892, %v1064
        %v1066 = vpop.f32.mrb[0].mxu0
        %v1067 = vpop.f32.mrb[0].mxu0
        %v1068 = vadd.f32 %v892, %v1067
        %v1069 = vpop.f32.mrb[0].mxu0
        %1070 = vmatprep.mubr.bf16.mxu0 %v852
        %1071 = vmatmul.mubr.bf16.gmra.mrb[0].mxu0 %v851
        %v1072 = vpop.f32.mrb[0].mxu0
        %v1073 = vadd.f32 %v892, %v1072
        %v1074 = vpop.f32.mrb[0].mxu0
        %v1075 = vpop.f32.mrb[0].mxu0
        %v1076 = vadd.f32 %v892, %v1075
        %v1077 = vpop.f32.mrb[0].mxu0
        %1078 = vmatprep.mubr.bf16.mxu0 %v854
        %1079 = vmatmul.mubr.bf16.gmra.mrb[0].mxu0 %v853
        %v1080 = vpop.f32.mrb[0].mxu0
        %v1081 = vadd.f32 %v892, %v1080
        %v1082 = vpop.f32.mrb[0].mxu0
        %v1083 = vpop.f32.mrb[0].mxu0
        %v1084 = vadd.f32 %v892, %v1083
        %v1085 = vpop.f32.mrb[0].mxu0
        %1086 = vdwg.mxu0
        %vm1087 = vcmp.gt.f32.partialorder %v1025, 0.0
        %vm1088 = vcmp.gt.f32.partialorder %v1028, 0.0
        %vm1089 = vcmp.gt.f32.partialorder %v1033, 0.0
        %vm1090 = vcmp.gt.f32.partialorder %v1036, 0.0
        %vm1091 = vcmp.gt.f32.partialorder %v1041, 0.0
        %vm1092 = vcmp.gt.f32.partialorder %v1044, 0.0
        %vm1093 = vcmp.gt.f32.partialorder %v1049, 0.0
        %vm1094 = vcmp.gt.f32.partialorder %v1052, 0.0
        %vm1095 = vcmp.gt.f32.partialorder %v1057, 0.0
        %vm1096 = vcmp.gt.f32.partialorder %v1060, 0.0
        %vm1097 = vcmp.gt.f32.partialorder %v1065, 0.0
        %vm1098 = vcmp.gt.f32.partialorder %v1068, 0.0
        %vm1099 = vcmp.gt.f32.partialorder %v1073, 0.0
        %vm1100 = vcmp.gt.f32.partialorder %v1076, 0.0
        %vm1101 = vcmp.gt.f32.partialorder %v1081, 0.0
        %vm1102 = vcmp.gt.f32.partialorder %v1084, 0.0
        %v1103 = vmul.f32 %v1025, 0.2
        %v1104 = vmul.f32 %v1028, 0.2
        %v1105 = vmul.f32 %v1033, 0.2
        %v1106 = vmul.f32 %v1036, 0.2
        %v1107 = vmul.f32 %v1041, 0.2
        %v1108 = vmul.f32 %v1044, 0.2
        %v1109 = vmul.f32 %v1049, 0.2
        %v1110 = vmul.f32 %v1052, 0.2
        %v1111 = vmul.f32 %v1057, 0.2
        %v1112 = vmul.f32 %v1060, 0.2
        %v1113 = vmul.f32 %v1065, 0.2
        %v1114 = vmul.f32 %v1068, 0.2
        %v1115 = vmul.f32 %v1073, 0.2
        %v1116 = vmul.f32 %v1076, 0.2
        %v1117 = vmul.f32 %v1081, 0.2
        %v1118 = vmul.f32 %v1084, 0.2
        %v1119 = vsel %vm1087, %v1025, %v1103
        %v1120 = vsel %vm1088, %v1028, %v1104
        %v1121 = vsel %vm1089, %v1033, %v1105
        %v1122 = vsel %vm1090, %v1036, %v1106
        %v1123 = vsel %vm1091, %v1041, %v1107
        %v1124 = vsel %vm1092, %v1044, %v1108
        %v1125 = vsel %vm1093, %v1049, %v1109
        %v1126 = vsel %vm1094, %v1052, %v1110
        %v1127 = vsel %vm1095, %v1057, %v1111
        %v1128 = vsel %vm1096, %v1060, %v1112
        %v1129 = vsel %vm1097, %v1065, %v1113
        %v1130 = vsel %vm1098, %v1068, %v1114
        %v1131 = vsel %vm1099, %v1073, %v1115
        %v1132 = vsel %vm1100, %v1076, %v1116
        %v1133 = vsel %vm1101, %v1081, %v1117
        %v1134 = vsel %vm1102, %v1084, %v1118
        %v1135 = vld [vmem:[%s7] sm:$0x1]
        %v1137 = vlaneseq
        %v1138 = vshrl.u32 %v1137, 7
        %v1139 = vsub.s32 0, %v1138
        %v1140 = vrot.slane %v1135, %v1139
        %v1142 = vmul.f32 %v1119, %v1140
        %v1143 = vmul.f32 %v1120, %v1140
        %v1144 = vmul.f32 %v1121, %v1140
        %v1145 = vmul.f32 %v1122, %v1140
        %v1146 = vmul.f32 %v1123, %v1140
        %v1147 = vmul.f32 %v1124, %v1140
        %v1148 = vmul.f32 %v1125, %v1140
        %v1149 = vmul.f32 %v1126, %v1140
        %v1150 = vmul.f32 %v1127, %v1140
        %v1151 = vmul.f32 %v1128, %v1140
        %v1152 = vmul.f32 %v1129, %v1140
        %v1153 = vmul.f32 %v1130, %v1140
        %v1154 = vmul.f32 %v1131, %v1140
        %v1155 = vmul.f32 %v1132, %v1140
        %v1156 = vmul.f32 %v1133, %v1140
        %v1157 = vmul.f32 %v1134, %v1140
        %1158 = vadd.xlane.f32.xlu0 %v1142
        %v1159 = vpop.xlane.xlu0 %1158
        %1160 = vadd.xlane.f32.xlu0 %v1143
        %v1161 = vpop.xlane.xlu0 %1160
        %1162 = vadd.xlane.f32.xlu0 %v1144
        %v1163 = vpop.xlane.xlu0 %1162
        %1164 = vadd.xlane.f32.xlu0 %v1145
        %v1165 = vpop.xlane.xlu0 %1164
        %1166 = vadd.xlane.f32.xlu0 %v1146
        %v1167 = vpop.xlane.xlu0 %1166
        %1168 = vadd.xlane.f32.xlu0 %v1147
        %v1169 = vpop.xlane.xlu0 %1168
        %1170 = vadd.xlane.f32.xlu0 %v1148
        %v1171 = vpop.xlane.xlu0 %1170
        %1172 = vadd.xlane.f32.xlu0 %v1149
        %v1173 = vpop.xlane.xlu0 %1172
        %1174 = vadd.xlane.f32.xlu0 %v1150
        %v1175 = vpop.xlane.xlu0 %1174
        %1176 = vadd.xlane.f32.xlu0 %v1151
        %v1177 = vpop.xlane.xlu0 %1176
        %1178 = vadd.xlane.f32.xlu0 %v1152
        %v1179 = vpop.xlane.xlu0 %1178
        %1180 = vadd.xlane.f32.xlu0 %v1153
        %v1181 = vpop.xlane.xlu0 %1180
        %1182 = vadd.xlane.f32.xlu0 %v1154
        %v1183 = vpop.xlane.xlu0 %1182
        %1184 = vadd.xlane.f32.xlu0 %v1155
        %v1185 = vpop.xlane.xlu0 %1184
        %1186 = vadd.xlane.f32.xlu0 %v1156
        %v1187 = vpop.xlane.xlu0 %1186
        %1188 = vadd.xlane.f32.xlu0 %v1157
        %v1189 = vpop.xlane.xlu0 %1188
        %v1190 = vld [vmem:[#allocation2] sm:$0x1]
        %v1192 = vlaneseq
        %v1193 = vshrl.u32 %v1192, 7
        %v1194 = vsub.s32 0, %v1193
        %v1195 = vrot.slane %v1190, %v1194
        %v1197 = vadd.f32 %v1159, %v1195
        %v1198 = vadd.f32 %v1161, %v1195
        %v1199 = vadd.f32 %v1163, %v1195
        %v1200 = vadd.f32 %v1165, %v1195
        %v1201 = vadd.f32 %v1167, %v1195
        %v1202 = vadd.f32 %v1169, %v1195
        %v1203 = vadd.f32 %v1171, %v1195
        %v1204 = vadd.f32 %v1173, %v1195
        %v1205 = vadd.f32 %v1175, %v1195
        %v1206 = vadd.f32 %v1177, %v1195
        %v1207 = vadd.f32 %v1179, %v1195
        %v1208 = vadd.f32 %v1181, %v1195
        %v1209 = vadd.f32 %v1183, %v1195
        %v1210 = vadd.f32 %v1185, %v1195
        %v1211 = vadd.f32 %v1187, %v1195
        %v1212 = vadd.f32 %v1189, %v1195
        %v1213 = vsub.f32 0.0, %v1197
        %v1214 = vsub.f32 0.0, %v1198
        %v1215 = vsub.f32 0.0, %v1199
        %v1216 = vsub.f32 0.0, %v1200
        %v1217 = vsub.f32 0.0, %v1201
        %v1218 = vsub.f32 0.0, %v1202
        %v1219 = vsub.f32 0.0, %v1203
        %v1220 = vsub.f32 0.0, %v1204
        %v1221 = vsub.f32 0.0, %v1205
        %v1222 = vsub.f32 0.0, %v1206
        %v1223 = vsub.f32 0.0, %v1207
        %v1224 = vsub.f32 0.0, %v1208
        %v1225 = vsub.f32 0.0, %v1209
        %v1226 = vsub.f32 0.0, %v1210
        %v1227 = vsub.f32 0.0, %v1211
        %v1228 = vsub.f32 0.0, %v1212
        %v1229 = vmax.f32 %v1213, 0.0
        %v1230 = vmax.f32 %v1214, 0.0
        %v1231 = vmax.f32 %v1215, 0.0
        %v1232 = vmax.f32 %v1216, 0.0
        %v1233 = vmax.f32 %v1217, 0.0
        %v1234 = vmax.f32 %v1218, 0.0
        %v1235 = vmax.f32 %v1219, 0.0
        %v1236 = vmax.f32 %v1220, 0.0
        %v1237 = vmax.f32 %v1221, 0.0
        %v1238 = vmax.f32 %v1222, 0.0
        %v1239 = vmax.f32 %v1223, 0.0
        %v1240 = vmax.f32 %v1224, 0.0
        %v1241 = vmax.f32 %v1225, 0.0
        %v1242 = vmax.f32 %v1226, 0.0
        %v1243 = vmax.f32 %v1227, 0.0
        %v1244 = vmax.f32 %v1228, 0.0
        %v1245 = vand.u32 2147483647, %v1213
        %v1246 = vand.u32 2147483647, %v1214
        %v1247 = vand.u32 2147483647, %v1215
        %v1248 = vand.u32 2147483647, %v1216
        %v1249 = vand.u32 2147483647, %v1217
        %v1250 = vand.u32 2147483647, %v1218
        %v1251 = vand.u32 2147483647, %v1219
        %v1252 = vand.u32 2147483647, %v1220
        %v1253 = vand.u32 2147483647, %v1221
        %v1254 = vand.u32 2147483647, %v1222
        %v1255 = vand.u32 2147483647, %v1223
        %v1256 = vand.u32 2147483647, %v1224
        %v1257 = vand.u32 2147483647, %v1225
        %v1258 = vand.u32 2147483647, %v1226
        %v1259 = vand.u32 2147483647, %v1227
        %v1260 = vand.u32 2147483647, %v1228
        %v1261 = vsub.f32 0.0, %v1245
        %v1262 = vsub.f32 0.0, %v1246
        %v1263 = vsub.f32 0.0, %v1247
        %v1264 = vsub.f32 0.0, %v1248
        %v1265 = vsub.f32 0.0, %v1249
        %v1266 = vsub.f32 0.0, %v1250
        %v1267 = vsub.f32 0.0, %v1251
        %v1268 = vsub.f32 0.0, %v1252
        %v1269 = vsub.f32 0.0, %v1253
        %v1270 = vsub.f32 0.0, %v1254
        %v1271 = vsub.f32 0.0, %v1255
        %v1272 = vsub.f32 0.0, %v1256
        %v1273 = vsub.f32 0.0, %v1257
        %v1274 = vsub.f32 0.0, %v1258
        %v1275 = vsub.f32 0.0, %v1259
        %v1276 = vsub.f32 0.0, %v1260
        %v1277 = vmul.f32 %v1261, 1.442695
        %v1278 = vpow.pop %v1277
        %v1279 = vmul.f32 %v1262, 1.442695
        %v1280 = vpow.pop %v1279
        %v1281 = vmul.f32 %v1263, 1.442695
        %v1282 = vpow.pop %v1281
        %v1283 = vmul.f32 %v1264, 1.442695
        %v1284 = vpow.pop %v1283
        %v1285 = vmul.f32 %v1265, 1.442695
        %v1286 = vpow.pop %v1285
        %v1287 = vmul.f32 %v1266, 1.442695
        %v1288 = vpow.pop %v1287
        %v1289 = vmul.f32 %v1267, 1.442695
        %v1290 = vpow.pop %v1289
        %v1291 = vmul.f32 %v1268, 1.442695
        %v1292 = vpow.pop %v1291
        %v1293 = vmul.f32 %v1269, 1.442695
        %v1294 = vpow.pop %v1293
        %v1295 = vmul.f32 %v1270, 1.442695
        %v1296 = vpow.pop %v1295
        %v1297 = vmul.f32 %v1271, 1.442695
        %v1298 = vpow.pop %v1297
        %v1299 = vmul.f32 %v1272, 1.442695
        %v1300 = vpow.pop %v1299
        %v1301 = vmul.f32 %v1273, 1.442695
        %v1302 = vpow.pop %v1301
        %v1303 = vmul.f32 %v1274, 1.442695
        %v1304 = vpow.pop %v1303
        %v1305 = vmul.f32 %v1275, 1.442695
        %v1306 = vpow.pop %v1305
        %v1307 = vmul.f32 %v1276, 1.442695
        %v1308 = vpow.pop %v1307
        %v1309 = vadd.f32 %v1278, 1.0
        %v1310 = vlog2.pop %v1309
        %v1311 = vmul.f32 %v1310, 0.6931472
        %v1312 = vmul.f32 -0.5, %v1278
        %v1313 = vadd.f32 %v1312, 1.0
        %v1314 = vmul.f32 %v1313, %v1278
        %v1315 = vand.u32 2147483647, %v1278
        %vm1316 = vcmp.lt.f32.partialorder %v1315, 0.0004427343
        %v1317 = vsel %vm1316, %v1314, %v1311
        %v1318 = vadd.f32 %v1280, 1.0
        %v1319 = vlog2.pop %v1318
        %v1320 = vmul.f32 %v1319, 0.6931472
        %v1321 = vmul.f32 -0.5, %v1280
        %v1322 = vadd.f32 %v1321, 1.0
        %v1323 = vmul.f32 %v1322, %v1280
        %v1324 = vand.u32 2147483647, %v1280
        %vm1325 = vcmp.lt.f32.partialorder %v1324, 0.0004427343
        %v1326 = vsel %vm1325, %v1323, %v1320
        %v1327 = vadd.f32 %v1282, 1.0
        %v1328 = vlog2.pop %v1327
        %v1329 = vmul.f32 %v1328, 0.6931472
        %v1330 = vmul.f32 -0.5, %v1282
        %v1331 = vadd.f32 %v1330, 1.0
        %v1332 = vmul.f32 %v1331, %v1282
        %v1333 = vand.u32 2147483647, %v1282
        %vm1334 = vcmp.lt.f32.partialorder %v1333, 0.0004427343
        %v1335 = vsel %vm1334, %v1332, %v1329
        %v1336 = vadd.f32 %v1284, 1.0
        %v1337 = vlog2.pop %v1336
        %v1338 = vmul.f32 %v1337, 0.6931472
        %v1339 = vmul.f32 -0.5, %v1284
        %v1340 = vadd.f32 %v1339, 1.0
        %v1341 = vmul.f32 %v1340, %v1284
        %v1342 = vand.u32 2147483647, %v1284
        %vm1343 = vcmp.lt.f32.partialorder %v1342, 0.0004427343
        %v1344 = vsel %vm1343, %v1341, %v1338
        %v1345 = vadd.f32 %v1286, 1.0
        %v1346 = vlog2.pop %v1345
        %v1347 = vmul.f32 %v1346, 0.6931472
        %v1348 = vmul.f32 -0.5, %v1286
        %v1349 = vadd.f32 %v1348, 1.0
        %v1350 = vmul.f32 %v1349, %v1286
        %v1351 = vand.u32 2147483647, %v1286
        %vm1352 = vcmp.lt.f32.partialorder %v1351, 0.0004427343
        %v1353 = vsel %vm1352, %v1350, %v1347
        %v1354 = vadd.f32 %v1288, 1.0
        %v1355 = vlog2.pop %v1354
        %v1356 = vmul.f32 %v1355, 0.6931472
        %v1357 = vmul.f32 -0.5, %v1288
        %v1358 = vadd.f32 %v1357, 1.0
        %v1359 = vmul.f32 %v1358, %v1288
        %v1360 = vand.u32 2147483647, %v1288
        %vm1361 = vcmp.lt.f32.partialorder %v1360, 0.0004427343
        %v1362 = vsel %vm1361, %v1359, %v1356
        %v1363 = vadd.f32 %v1290, 1.0
        %v1364 = vlog2.pop %v1363
        %v1365 = vmul.f32 %v1364, 0.6931472
        %v1366 = vmul.f32 -0.5, %v1290
        %v1367 = vadd.f32 %v1366, 1.0
        %v1368 = vmul.f32 %v1367, %v1290
        %v1369 = vand.u32 2147483647, %v1290
        %vm1370 = vcmp.lt.f32.partialorder %v1369, 0.0004427343
        %v1371 = vsel %vm1370, %v1368, %v1365
        %v1372 = vadd.f32 %v1292, 1.0
        %v1373 = vlog2.pop %v1372
        %v1374 = vmul.f32 %v1373, 0.6931472
        %v1375 = vmul.f32 -0.5, %v1292
        %v1376 = vadd.f32 %v1375, 1.0
        %v1377 = vmul.f32 %v1376, %v1292
        %v1378 = vand.u32 2147483647, %v1292
        %vm1379 = vcmp.lt.f32.partialorder %v1378, 0.0004427343
        %v1380 = vsel %vm1379, %v1377, %v1374
        %v1381 = vadd.f32 %v1294, 1.0
        %v1382 = vlog2.pop %v1381
        %v1383 = vmul.f32 %v1382, 0.6931472
        %v1384 = vmul.f32 -0.5, %v1294
        %v1385 = vadd.f32 %v1384, 1.0
        %v1386 = vmul.f32 %v1385, %v1294
        %v1387 = vand.u32 2147483647, %v1294
        %vm1388 = vcmp.lt.f32.partialorder %v1387, 0.0004427343
        %v1389 = vsel %vm1388, %v1386, %v1383
        %v1390 = vadd.f32 %v1296, 1.0
        %v1391 = vlog2.pop %v1390
        %v1392 = vmul.f32 %v1391, 0.6931472
        %v1393 = vmul.f32 -0.5, %v1296
        %v1394 = vadd.f32 %v1393, 1.0
        %v1395 = vmul.f32 %v1394, %v1296
        %v1396 = vand.u32 2147483647, %v1296
        %vm1397 = vcmp.lt.f32.partialorder %v1396, 0.0004427343
        %v1398 = vsel %vm1397, %v1395, %v1392
        %v1399 = vadd.f32 %v1298, 1.0
        %v1400 = vlog2.pop %v1399
        %v1401 = vmul.f32 %v1400, 0.6931472
        %v1402 = vmul.f32 -0.5, %v1298
        %v1403 = vadd.f32 %v1402, 1.0
        %v1404 = vmul.f32 %v1403, %v1298
        %v1405 = vand.u32 2147483647, %v1298
        %vm1406 = vcmp.lt.f32.partialorder %v1405, 0.0004427343
        %v1407 = vsel %vm1406, %v1404, %v1401
        %v1408 = vadd.f32 %v1300, 1.0
        %v1409 = vlog2.pop %v1408
        %v1410 = vmul.f32 %v1409, 0.6931472
        %v1411 = vmul.f32 -0.5, %v1300
        %v1412 = vadd.f32 %v1411, 1.0
        %v1413 = vmul.f32 %v1412, %v1300
        %v1414 = vand.u32 2147483647, %v1300
        %vm1415 = vcmp.lt.f32.partialorder %v1414, 0.0004427343
        %v1416 = vsel %vm1415, %v1413, %v1410
        %v1417 = vadd.f32 %v1302, 1.0
        %v1418 = vlog2.pop %v1417
        %v1419 = vmul.f32 %v1418, 0.6931472
        %v1420 = vmul.f32 -0.5, %v1302
        %v1421 = vadd.f32 %v1420, 1.0
        %v1422 = vmul.f32 %v1421, %v1302
        %v1423 = vand.u32 2147483647, %v1302
        %vm1424 = vcmp.lt.f32.partialorder %v1423, 0.0004427343
        %v1425 = vsel %vm1424, %v1422, %v1419
        %v1426 = vadd.f32 %v1304, 1.0
        %v1427 = vlog2.pop %v1426
        %v1428 = vmul.f32 %v1427, 0.6931472
        %v1429 = vmul.f32 -0.5, %v1304
        %v1430 = vadd.f32 %v1429, 1.0
        %v1431 = vmul.f32 %v1430, %v1304
        %v1432 = vand.u32 2147483647, %v1304
        %vm1433 = vcmp.lt.f32.partialorder %v1432, 0.0004427343
        %v1434 = vsel %vm1433, %v1431, %v1428
        %v1435 = vadd.f32 %v1306, 1.0
        %v1436 = vlog2.pop %v1435
        %v1437 = vmul.f32 %v1436, 0.6931472
        %v1438 = vmul.f32 -0.5, %v1306
        %v1439 = vadd.f32 %v1438, 1.0
        %v1440 = vmul.f32 %v1439, %v1306
        %v1441 = vand.u32 2147483647, %v1306
        %vm1442 = vcmp.lt.f32.partialorder %v1441, 0.0004427343
        %v1443 = vsel %vm1442, %v1440, %v1437
        %v1444 = vadd.f32 %v1308, 1.0
        %v1445 = vlog2.pop %v1444
        %v1446 = vmul.f32 %v1445, 0.6931472
        %v1447 = vmul.f32 -0.5, %v1308
        %v1448 = vadd.f32 %v1447, 1.0
        %v1449 = vmul.f32 %v1448, %v1308
        %v1450 = vand.u32 2147483647, %v1308
        %vm1451 = vcmp.lt.f32.partialorder %v1450, 0.0004427343
        %v1452 = vsel %vm1451, %v1449, %v1446
        %v1453 = vadd.f32 %v1229, %v1317
        %v1454 = vadd.f32 %v1230, %v1326
        %v1455 = vadd.f32 %v1231, %v1335
        %v1456 = vadd.f32 %v1232, %v1344
        %v1457 = vadd.f32 %v1233, %v1353
        %v1458 = vadd.f32 %v1234, %v1362
        %v1459 = vadd.f32 %v1235, %v1371
        %v1460 = vadd.f32 %v1236, %v1380
        %v1461 = vadd.f32 %v1237, %v1389
        %v1462 = vadd.f32 %v1238, %v1398
        %v1463 = vadd.f32 %v1239, %v1407
        %v1464 = vadd.f32 %v1240, %v1416
        %v1465 = vadd.f32 %v1241, %v1425
        %v1466 = vadd.f32 %v1242, %v1434
        %v1467 = vadd.f32 %v1243, %v1443
        %v1468 = vadd.f32 %v1244, %v1452
        %vm1469 = vcmask 7168
        %1470 = vst.msk [vmem:[%s399] sm:$0xff] %vm1469, %v1453
        %1471 = vst.msk [vmem:[%s399 + $0x8] sm:$0xff] %vm1469, %v1454
        %1472 = vst.msk [vmem:[%s399 + $0x10] sm:$0xff] %vm1469, %v1455
        %1473 = vst.msk [vmem:[%s399 + $0x18] sm:$0xff] %vm1469, %v1456
        %1474 = vst.msk [vmem:[%s399 + $0x20] sm:$0xff] %vm1469, %v1457
        %1475 = vst.msk [vmem:[%s399 + $0x28] sm:$0xff] %vm1469, %v1458
        %1476 = vst.msk [vmem:[%s399 + $0x30] sm:$0xff] %vm1469, %v1459
        %1477 = vst.msk [vmem:[%s399 + $0x38] sm:$0xff] %vm1469, %v1460
        %1478 = vst.msk [vmem:[%s399 + $0x40] sm:$0xff] %vm1469, %v1461
        %1479 = vst.msk [vmem:[%s399 + $0x48] sm:$0xff] %vm1469, %v1462
        %1480 = vst.msk [vmem:[%s399 + $0x50] sm:$0xff] %vm1469, %v1463
        %1481 = vst.msk [vmem:[%s399 + $0x58] sm:$0xff] %vm1469, %v1464
        %1482 = vst.msk [vmem:[%s399 + $0x60] sm:$0xff] %vm1469, %v1465
        %1483 = vst.msk [vmem:[%s399 + $0x68] sm:$0xff] %vm1469, %v1466
        %1484 = vst.msk [vmem:[%s399 + $0x70] sm:$0xff] %vm1469, %v1467
        %1485 = vst.msk [vmem:[%s399 + $0x78] sm:$0xff] %vm1469, %v1468
        %s1486 = smul.u32 16, %s27
        %p1487 = scmp.lt.s32.totalorder %s1486, 31
        %s1488 = scalar_select %p1487, %s1486, 31
        %s1489 = smul.addr %s1488, 8
        %s1490 = scalar_lea.vmem %s9, %s1489
        // Predicated region
        $region73: #{tpu_custom_call.1} parent=55 // pred_check
          %p1491 = pneg %p239
        $region74: #{tpu_custom_call.1} parent=55 // pred_check_branch
          %1493 = sbr.rel (%p1491) target = $region76
        $region75: #{tpu_custom_call.1} parent=55 // pred_region
          %s1494 = smul.u32 16, %s27
        $region76: #{tpu_custom_call.1} parent=55 // pred_fallthru
          _
      $region56: #{tpu_custom_call.1} parent=5 // pred_fallthru
        _
      %p1495 = scmp.le.s32.totalorder 2, %s22
      // Predicated region
      $region77: #{tpu_custom_call.1} parent=5 // pred_check
        %p1496 = pneg %p1495
      $region78: #{tpu_custom_call.1} parent=5 // pred_check_branch
        %1498 = sbr.rel (%p1496) target = $region80
      $region79: #{tpu_custom_call.1} parent=5 // pred_region
        %s1499 = ssub.s32 %s22, 2
        // Predicated region
        $region81: #{tpu_custom_call.1} parent=79 // pred_check
          %p1500 = pneg %p245
        $region82: #{tpu_custom_call.1} parent=79 // pred_check_branch
          %1502 = sbr.rel (%p1500) target = $region84
        $region83: #{tpu_custom_call.1} parent=79 // pred_region
          %s1503 = smul.u32 16, %s28
          %p1504 = scmp.lt.s32.totalorder %s1503, 31
          %s1505 = scalar_select %p1504, %s1503, 31
          %s1506 = smul.addr %s1505, 8
          %s1507 = scalar_lea.vmem %s9, %s1506
        $region84: #{tpu_custom_call.1} parent=79 // pred_fallthru
          _
      $region80: #{tpu_custom_call.1} parent=5 // pred_fallthru
        _
    $region6: #{tpu_custom_call.1} parent=1 // loop_footer
      %s26 = sadd.s32 1, %s22
    $region7: #{tpu_custom_call.1} parent=1 // loop_footer_branch
      %21 = sbr.rel target = $region3
    $region8: #{tpu_custom_call.1} parent=1 // loop_exit
      _
    %1508 = vsyncpa [#allocation4], 1
    %s1509 = scalar_lea.sflag [#allocation4], 1
    %1510 = vsyncpa %s1509, 1
    %1511 = vsyncpa [#allocation6], 1
    %1512 = vsyncpa [#allocation9], 1

</llo_original>
